<compile_context>
chip_gen: v7x
topology: tpu7x:2x2x1
jax: 0.10.0
libtpu: 0.0.40
codegen_flags: <defaults>
</compile_context>

<pallas_src>
from functools import partial

import jax
import jax.numpy as jnp
from jax import lax
from jax.experimental import pallas as pl
from jax.experimental.pallas import tpu as pltpu


# ----------------------------- Pallas kernel -------------------------------

def _cnn_kernel(x_ref, a1_ref, b1_ref, a2_ref, b2_ref, w3_ref, b3_ref,
                w4_ref, b4_ref, o_ref):
    f32, bf16 = jnp.float32, jnp.bfloat16
    tb = o_ref.shape[0]                      # samples per grid step (mult of 8)

    # ---- conv1 (1->8, 5x5, valid) + ReLU + 2x2 max pool --------------------
    # x_ref[0]: (24*tb, 140) banded im2col rows built in the wrapper;
    # row (r*6 + k)*tb + b  <->  sample b, conv1 output row oh = 4k + r,
    # lanes (dh*28 + iw).  One matmul covers all 4 row-residue streams.
    x2d = x_ref[0]                                                  # (24tb, 140) bf16
    y1 = jnp.dot(x2d, a1_ref[...], preferred_element_type=f32)      # (24tb, 256)
    # Even output widths live in lanes 0..127, odd in 128..255, so the width
    # pool is a plain 128-lane max (bias/ReLU commute with the max).
    wp1 = jnp.maximum(jnp.maximum(y1[:, :128], y1[:, 128:]) + b1_ref[...], 0.0)
    # Height pool: rows (4k,4k+1) -> even pooled rows, (4k+2,4k+3) -> odd.
    l2e = jnp.maximum(wp1[0 * 6 * tb:1 * 6 * tb, :],
                      wp1[1 * 6 * tb:2 * 6 * tb, :]).astype(bf16)   # h' = 2k
    l2o = jnp.maximum(wp1[2 * 6 * tb:3 * 6 * tb, :],
                      wp1[3 * 6 * tb:4 * 6 * tb, :]).astype(bf16)   # h' = 2k+1

    # ---- conv2 (8->16, 5x5, valid) + ReLU + 2x2 max pool --------------------
    # K-split accumulation over the 5 kernel rows; every slice is a whole-tile
    # aligned row window of an l2 parity stream (rows are (k, sample)).
    pooled = []
    for q in range(2):                       # conv2 output-row parity (oh2 = 2j+q)
        z = None
        for dh in range(5):
            t = q + dh
            src = l2e if (t % 2 == 0) else l2o
            piece = src[(t // 2) * tb:(t // 2 + 4) * tb, :]         # (4tb, 128)
            d = jnp.dot(piece, a2_ref[dh], preferred_element_type=f32)
            z = d if z is None else z + d                           # (4tb, 256)
        pooled.append(jnp.maximum(
            jnp.maximum(z[:, :128], z[:, 128:]) + b2_ref[...], 0.0))
    p2 = jnp.maximum(pooled[0], pooled[1]).astype(bf16)             # (4tb, 128)

    # ---- flatten + fc1 + ReLU + (dropout = identity) + fc2 ------------------
    # fc1 as a K-split accumulation over oh3 (avoids any lane concat).
    acc = None
    for j in range(4):
        d = jnp.dot(p2[j * tb:(j + 1) * tb, :], w3_ref[j],
                    preferred_element_type=f32)                     # (tb, 128)
        acc = d if acc is None else acc + d
    l6 = jnp.maximum(acc + b3_ref[...], 0.0).astype(bf16)           # (tb, 128)
    # TODO(synk): nn.Dropout(0.2) is treated as inference-mode identity here.
    logits = jnp.dot(l6, w4_ref[...], preferred_element_type=f32) + b4_ref[...]
    o_ref[...] = logits.astype(o_ref.dtype)                         # (tb, 128)


# --------------------------- Parameter packing -----------------------------

def init_params(key):
    # Deterministic synthetic parameters with the nn.Module's shapes.
    ks = jax.random.split(key, 8)
    s = 0.05
    return {
        "w1": jax.random.normal(ks[0], (8, 1, 5, 5), jnp.float32) * s,   # conv1.weight
        "b1": jax.random.normal(ks[1], (8,), jnp.float32) * s,           # conv1.bias
        "w2": jax.random.normal(ks[2], (16, 8, 5, 5), jnp.float32) * s,  # conv2.weight
        "b2": jax.random.normal(ks[3], (16,), jnp.float32) * s,          # conv2.bias
        "wfc1": jax.random.normal(ks[4], (256, 128), jnp.float32) * s,   # fc1.weight.T
        "bfc1": jax.random.normal(ks[5], (128,), jnp.float32) * s,       # fc1.bias
        "wfc2": jax.random.normal(ks[6], (128, 10), jnp.float32) * s,    # fc2.weight.T
        "bfc2": jax.random.normal(ks[7], (10,), jnp.float32) * s,        # fc2.bias
    }


def pack_params(p):
    # One-time repack of torch-layout weights into the banded / 128-lane-aligned
    # matrices the fused kernel consumes (done once, outside the jitted forward).
    f32, bf16 = jnp.float32, jnp.bfloat16
    dw = jnp.arange(5)

    # conv1 banded matrix: rows (dh*28 + iw); even output cols (ow_idx*8+co) in
    # lanes 0..95, odd in lanes 128..223, zero elsewhere.
    w1k = p["w1"][:, 0, :, :].astype(f32)                         # (co, dh, dw)
    iw, ow = jnp.arange(28), jnp.arange(24)
    m1 = (iw[None, :, None] == ow[None, None, :] + dw[:, None, None]).astype(f32)
    a1f = jnp.einsum("cad,diw->aiwc", w1k, m1)                    # (5, 28, 24, 8)
    a1 = jnp.zeros((140, 256), f32)
    a1 = a1.at[:, 0:96].set(a1f[:, :, 0::2, :].reshape(140, 96))
    a1 = a1.at[:, 128:224].set(a1f[:, :, 1::2, :].reshape(140, 96))
    b1 = jnp.zeros((1, 128), f32).at[0, :96].set(jnp.tile(p["b1"].astype(f32), 12))

    # conv2 banded matrices, one (128, 256) block per kernel row dh:
    # rows (owp*8 + ci) for owp<12 (rows 96..127 zero); even output cols
    # (ow2_idx*16+co) in lanes 0..63, odd in lanes 128..191.
    owp, ow2 = jnp.arange(12), jnp.arange(8)
    m2 = (owp[None, :, None] == ow2[None, None, :] + dw[:, None, None]).astype(f32)
    a2f = jnp.einsum("ciad,duo->auioc", p["w2"].astype(f32), m2)  # (5,12,8,8,16)
    a2 = jnp.zeros((5, 128, 256), f32)
    a2 = a2.at[:, :96, 0:64].set(a2f[:, :, :, 0::2, :].reshape(5, 96, 64))
    a2 = a2.at[:, :96, 128:192].set(a2f[:, :, :, 1::2, :].reshape(5, 96, 64))
    b2 = jnp.zeros((1, 128), f32).at[0, :64].set(jnp.tile(p["b2"].astype(f32), 4))

    # fc1: torch flatten order (co, oh3, ow3) -> kernel lane order (ow3*16+co),
    # K-split into one zero-padded (128, 128) block per oh3.
    w3t = (p["wfc1"].astype(f32).reshape(16, 4, 4, 128)
           .transpose(1, 2, 0, 3).reshape(4, 64, 128))
    w3 = jnp.zeros((4, 128, 128), f32).at[:, :64, :].set(w3t)
    b3 = p["bfc1"].astype(f32).reshape(1, 128)

    # fc2 padded to a lane-dense 128-column output (zeros in lanes 10..127).
    w4 = jnp.zeros((128, 128), f32).at[:, :10].set(p["wfc2"].astype(f32))
    b4 = jnp.zeros((1, 128), f32).at[0, :10].set(p["bfc2"].astype(f32))

    return {
        "a1": a1.astype(bf16), "b1": b1,
        "a2": a2.astype(bf16), "b2": b2,
        "w3": w3.astype(bf16), "b3": b3,
        "w4": w4.astype(bf16), "b4": b4,
    }


# ------------------------------ Forward pass --------------------------------

@partial(jax.jit, static_argnames=("tb",))
def cnn_forward(x_nchw, packed, tb=128):
    # x_nchw: (N, 1, 28, 28) float32 -> logits (N, 10) float32
    n = x_nchw.shape[0]
    bt = min(int(tb), ((n + 7) // 8) * 8)     # per-block batch, multiple of 8
    bt = max(8, (bt // 8) * 8)
    nblk = -(-n // bt)
    n_pad = nblk * bt

    img = x_nchw.reshape(n, 28, 28)
    if n_pad != n:
        img = jnp.pad(img, ((0, n_pad - n), (0, 0), (0, 0)))

    # Hoisted conv1 im2col (banded rows), grouped by output-row residue
    # r = oh % 4 so the in-kernel height pool is an aligned whole-tile max.
    # Block-row layout: row (r*6 + k)*bt + b  <->  sample b of the block,
    # conv1 output row oh = 4k + r; lanes are (dh*28 + iw).
    r = jnp.arange(4)[:, None, None]
    k = jnp.arange(6)[None, :, None]
    dh = jnp.arange(5)[None, None, :]
    rows = 4 * k + r + dh                                         # (4, 6, 5)
    xb = img[:, rows, :].reshape(n_pad, 24, 140)                  # (n_pad, 24, 140)
    xb = (xb.reshape(nblk, bt, 24, 140).transpose(0, 2, 1, 3)
            .reshape(nblk, 24 * bt, 140).astype(jnp.bfloat16))

    flops = 2 * n_pad * (24 * 140 * 256 + 10 * 4 * 128 * 256
                         + 4 * 128 * 128 + 128 * 128)
    bytes_accessed = (int(xb.size) * xb.dtype.itemsize
                      + sum(int(v.size) * v.dtype.itemsize for v in packed.values())
                      + n_pad * 128 * 4)

    def full(a):
        nd = a.ndim
        return pl.BlockSpec(a.shape, lambda i, _nd=nd: (0,) * _nd)

    out = pl.pallas_call(
        _cnn_kernel,
        out_shape=jax.ShapeDtypeStruct((n_pad, 128), jnp.float32),
        grid=(nblk,),
        in_specs=[
            pl.BlockSpec((1, 24 * bt, 140), lambda i: (i, 0, 0)),
            full(packed["a1"]), full(packed["b1"]),
            full(packed["a2"]), full(packed["b2"]),
            full(packed["w3"]), full(packed["b3"]),
            full(packed["w4"]), full(packed["b4"]),
        ],
        out_specs=pl.BlockSpec((bt, 128), lambda i: (i, 0)),
        compiler_params=pltpu.CompilerParams(dimension_semantics=("parallel",)),
        cost_estimate=pl.CostEstimate(flops=flops, transcendentals=0,
                                      bytes_accessed=bytes_accessed),
    )(xb, packed["a1"], packed["b1"], packed["a2"], packed["b2"],
      packed["w3"], packed["b3"], packed["w4"], packed["b4"])
    return out[:n, :10]


# Pure-JAX reference (matches the PyTorch module exactly, float32).
def reference_forward(x_nchw, p):
    dn = ("NCHW", "OIHW", "NCHW")
    l1 = lax.conv_general_dilated(x_nchw, p["w1"], (1, 1), "VALID", dimension_numbers=dn)
    l1 = jax.nn.relu(l1 + p["b1"][None, :, None, None])
    l2 = lax.reduce_window(l1, -jnp.inf, lax.max, (1, 1, 2, 2), (1, 1, 2, 2), "VALID")
    l3 = lax.conv_general_dilated(l2, p["w2"], (1, 1), "VALID", dimension_numbers=dn)
    l3 = jax.nn.relu(l3 + p["b2"][None, :, None, None])
    l4 = lax.reduce_window(l3, -jnp.inf, lax.max, (1, 1, 2, 2), (1, 1, 2, 2), "VALID")
    l5 = l4.reshape(l4.shape[0], -1)
    l6 = jax.nn.relu(l5 @ p["wfc1"] + p["bfc1"])
    return l6 @ p["wfc2"] + p["bfc2"]


if __name__ == "__main__":
    key = jax.random.PRNGKey(0)
    k_x, k_x2, k_p = jax.random.split(key, 3)
    params = init_params(k_p)
    packed = pack_params(params)

    # 28x28 input is required by the architecture (fc1 expects 16*4*4 = 256).
    x = jax.random.normal(k_x, (2, 1, 28, 28), jnp.float32)
    logits = cnn_forward(x, packed)
    jax.block_until_ready(logits)
    assert logits.shape == (2, 10) and logits.dtype == jnp.float32
    ref = reference_forward(x, params)
    err = float(jnp.max(jnp.abs(logits - ref)))
    assert err < 5e-2, f"kernel/reference mismatch: {err}"

    # Exercise the multi-block grid + batch-padding path with a small tile.
    x2 = jax.random.normal(k_x2, (20, 1, 28, 28), jnp.float32)
    logits2 = cnn_forward(x2, packed, tb=8)
    jax.block_until_ready(logits2)
    ref2 = reference_forward(x2, params)
    err2 = float(jnp.max(jnp.abs(logits2 - ref2)))
    assert err2 < 5e-2, f"kernel/reference mismatch (batched): {err2}"

    print("KERNEL_OK")
</pallas_src>

<mosaic_0001>
module attributes {stable_mosaic.version = 11 : i64} {
  func.func @_cnn_kernel(%arg0: i32, %arg1: memref<1x192x140xbf16, #tpu.memory_space<vmem>>, %arg2: memref<140x256xbf16, #tpu.memory_space<vmem>>, %arg3: memref<1x128xf32, #tpu.memory_space<vmem>>, %arg4: memref<5x128x256xbf16, #tpu.memory_space<vmem>>, %arg5: memref<1x128xf32, #tpu.memory_space<vmem>>, %arg6: memref<4x128x128xbf16, #tpu.memory_space<vmem>>, %arg7: memref<1x128xf32, #tpu.memory_space<vmem>>, %arg8: memref<128x128xbf16, #tpu.memory_space<vmem>>, %arg9: memref<1x128xf32, #tpu.memory_space<vmem>>, %arg10: memref<8x128xf32, #tpu.memory_space<vmem>>) attributes {dimension_semantics = [#tpu.dimension_semantics<parallel>], iteration_bounds = array<i64: 1>, scalar_prefetch = 0 : i64, scratch_operands = 0 : i64, tpu.core_type = #tpu.core_type<tc>, window_params = [{transform_indices = @transform_0, window_bounds = array<i64: 1, 192, 140>}, {pipeline_mode = #tpu.pipeline_mode<synchronous>, transform_indices = @transform_1, window_bounds = array<i64: 140, 256>}, {pipeline_mode = #tpu.pipeline_mode<synchronous>, transform_indices = @transform_2, window_bounds = array<i64: 1, 128>}, {pipeline_mode = #tpu.pipeline_mode<synchronous>, transform_indices = @transform_3, window_bounds = array<i64: 5, 128, 256>}, {pipeline_mode = #tpu.pipeline_mode<synchronous>, transform_indices = @transform_4, window_bounds = array<i64: 1, 128>}, {pipeline_mode = #tpu.pipeline_mode<synchronous>, transform_indices = @transform_5, window_bounds = array<i64: 4, 128, 128>}, {pipeline_mode = #tpu.pipeline_mode<synchronous>, transform_indices = @transform_6, window_bounds = array<i64: 1, 128>}, {pipeline_mode = #tpu.pipeline_mode<synchronous>, transform_indices = @transform_7, window_bounds = array<i64: 128, 128>}, {pipeline_mode = #tpu.pipeline_mode<synchronous>, transform_indices = @transform_8, window_bounds = array<i64: 1, 128>}, {transform_indices = @transform_9, window_bounds = array<i64: 8, 128>}]} {
    %c0 = arith.constant 0 : index
    %c0_0 = arith.constant 0 : index
    %c0_1 = arith.constant 0 : index
    %0 = vector.load %arg1[%c0, %c0_0, %c0_1] : memref<1x192x140xbf16, #tpu.memory_space<vmem>>, vector<1x192x140xbf16>
    %1 = vector.shape_cast %0 : vector<1x192x140xbf16> to vector<192x140xbf16>
    %c0_2 = arith.constant 0 : index
    %c0_3 = arith.constant 0 : index
    %2 = vector.load %arg2[%c0_2, %c0_3] : memref<140x256xbf16, #tpu.memory_space<vmem>>, vector<140x256xbf16>
    %cst = arith.constant dense<0.000000e+00> : vector<192x256xf32>
    %3 = tpu.matmul %1, %2, %cst {dimension_numbers = #tpu.dot_dimension_numbers<[1], [0], [0], [1], [0, 0, 1, 1], [], []>} : vector<192x140xbf16>, vector<140x256xbf16>, vector<192x256xf32> -> vector<192x256xf32>
    %4 = vector.extract_strided_slice %3 {offsets = [0, 0], sizes = [192, 128], strides = [1, 1]} : vector<192x256xf32> to vector<192x128xf32>
    %5 = vector.extract_strided_slice %3 {offsets = [0, 128], sizes = [192, 128], strides = [1, 1]} : vector<192x256xf32> to vector<192x128xf32>
    %6 = arith.maximumf %4, %5 : vector<192x128xf32>
    %c0_4 = arith.constant 0 : index
    %c0_5 = arith.constant 0 : index
    %7 = vector.load %arg3[%c0_4, %c0_5] : memref<1x128xf32, #tpu.memory_space<vmem>>, vector<1x128xf32>
    %8 = vector.broadcast %7 : vector<1x128xf32> to vector<192x128xf32>
    %9 = arith.addf %6, %8 : vector<192x128xf32>
    %cst_6 = arith.constant 0.000000e+00 : f32
    %10 = vector.broadcast %cst_6 : f32 to vector<192x128xf32>
    %11 = arith.maximumf %9, %10 : vector<192x128xf32>
    %12 = vector.extract_strided_slice %11 {offsets = [0, 0], sizes = [48, 128], strides = [1, 1]} : vector<192x128xf32> to vector<48x128xf32>
    %13 = vector.extract_strided_slice %11 {offsets = [48, 0], sizes = [48, 128], strides = [1, 1]} : vector<192x128xf32> to vector<48x128xf32>
    %14 = arith.maximumf %12, %13 : vector<48x128xf32>
    %15 = arith.truncf %14 : vector<48x128xf32> to vector<48x128xbf16>
    %16 = vector.extract_strided_slice %11 {offsets = [96, 0], sizes = [48, 128], strides = [1, 1]} : vector<192x128xf32> to vector<48x128xf32>
    %17 = vector.extract_strided_slice %11 {offsets = [144, 0], sizes = [48, 128], strides = [1, 1]} : vector<192x128xf32> to vector<48x128xf32>
    %18 = arith.maximumf %16, %17 : vector<48x128xf32>
    %19 = arith.truncf %18 : vector<48x128xf32> to vector<48x128xbf16>
    %20 = vector.extract_strided_slice %15 {offsets = [0, 0], sizes = [32, 128], strides = [1, 1]} : vector<48x128xbf16> to vector<32x128xbf16>
    %c0_7 = arith.constant 0 : index
    %c0_8 = arith.constant 0 : index
    %c0_9 = arith.constant 0 : index
    %21 = vector.load %arg4[%c0_7, %c0_8, %c0_9] : memref<5x128x256xbf16, #tpu.memory_space<vmem>>, vector<1x128x256xbf16>
    %22 = vector.shape_cast %21 : vector<1x128x256xbf16> to vector<128x256xbf16>
    %cst_10 = arith.constant dense<0.000000e+00> : vector<32x256xf32>
    %23 = tpu.matmul %20, %22, %cst_10 {dimension_numbers = #tpu.dot_dimension_numbers<[1], [0], [0], [1], [0, 0, 1, 1], [], []>} : vector<32x128xbf16>, vector<128x256xbf16>, vector<32x256xf32> -> vector<32x256xf32>
    %24 = vector.extract_strided_slice %19 {offsets = [0, 0], sizes = [32, 128], strides = [1, 1]} : vector<48x128xbf16> to vector<32x128xbf16>
    %c1 = arith.constant 1 : index
    %c0_11 = arith.constant 0 : index
    %c0_12 = arith.constant 0 : index
    %25 = vector.load %arg4[%c1, %c0_11, %c0_12] : memref<5x128x256xbf16, #tpu.memory_space<vmem>>, vector<1x128x256xbf16>
    %26 = vector.shape_cast %25 : vector<1x128x256xbf16> to vector<128x256xbf16>
    %cst_13 = arith.constant dense<0.000000e+00> : vector<32x256xf32>
    %27 = tpu.matmul %24, %26, %cst_13 {dimension_numbers = #tpu.dot_dimension_numbers<[1], [0], [0], [1], [0, 0, 1, 1], [], []>} : vector<32x128xbf16>, vector<128x256xbf16>, vector<32x256xf32> -> vector<32x256xf32>
    %28 = arith.addf %23, %27 : vector<32x256xf32>
    %29 = vector.extract_strided_slice %15 {offsets = [8, 0], sizes = [32, 128], strides = [1, 1]} : vector<48x128xbf16> to vector<32x128xbf16>
    %c2 = arith.constant 2 : index
    %c0_14 = arith.constant 0 : index
    %c0_15 = arith.constant 0 : index
    %30 = vector.load %arg4[%c2, %c0_14, %c0_15] : memref<5x128x256xbf16, #tpu.memory_space<vmem>>, vector<1x128x256xbf16>
    %31 = vector.shape_cast %30 : vector<1x128x256xbf16> to vector<128x256xbf16>
    %cst_16 = arith.constant dense<0.000000e+00> : vector<32x256xf32>
    %32 = tpu.matmul %29, %31, %cst_16 {dimension_numbers = #tpu.dot_dimension_numbers<[1], [0], [0], [1], [0, 0, 1, 1], [], []>} : vector<32x128xbf16>, vector<128x256xbf16>, vector<32x256xf32> -> vector<32x256xf32>
    %33 = arith.addf %28, %32 : vector<32x256xf32>
    %34 = vector.extract_strided_slice %19 {offsets = [8, 0], sizes = [32, 128], strides = [1, 1]} : vector<48x128xbf16> to vector<32x128xbf16>
    %c3 = arith.constant 3 : index
    %c0_17 = arith.constant 0 : index
    %c0_18 = arith.constant 0 : index
    %35 = vector.load %arg4[%c3, %c0_17, %c0_18] : memref<5x128x256xbf16, #tpu.memory_space<vmem>>, vector<1x128x256xbf16>
    %36 = vector.shape_cast %35 : vector<1x128x256xbf16> to vector<128x256xbf16>
    %cst_19 = arith.constant dense<0.000000e+00> : vector<32x256xf32>
    %37 = tpu.matmul %34, %36, %cst_19 {dimension_numbers = #tpu.dot_dimension_numbers<[1], [0], [0], [1], [0, 0, 1, 1], [], []>} : vector<32x128xbf16>, vector<128x256xbf16>, vector<32x256xf32> -> vector<32x256xf32>
    %38 = arith.addf %33, %37 : vector<32x256xf32>
    %39 = vector.extract_strided_slice %15 {offsets = [16, 0], sizes = [32, 128], strides = [1, 1]} : vector<48x128xbf16> to vector<32x128xbf16>
    %c4 = arith.constant 4 : index
    %c0_20 = arith.constant 0 : index
    %c0_21 = arith.constant 0 : index
    %40 = vector.load %arg4[%c4, %c0_20, %c0_21] : memref<5x128x256xbf16, #tpu.memory_space<vmem>>, vector<1x128x256xbf16>
    %41 = vector.shape_cast %40 : vector<1x128x256xbf16> to vector<128x256xbf16>
    %cst_22 = arith.constant dense<0.000000e+00> : vector<32x256xf32>
    %42 = tpu.matmul %39, %41, %cst_22 {dimension_numbers = #tpu.dot_dimension_numbers<[1], [0], [0], [1], [0, 0, 1, 1], [], []>} : vector<32x128xbf16>, vector<128x256xbf16>, vector<32x256xf32> -> vector<32x256xf32>
    %43 = arith.addf %38, %42 : vector<32x256xf32>
    %44 = vector.extract_strided_slice %43 {offsets = [0, 0], sizes = [32, 128], strides = [1, 1]} : vector<32x256xf32> to vector<32x128xf32>
    %45 = vector.extract_strided_slice %43 {offsets = [0, 128], sizes = [32, 128], strides = [1, 1]} : vector<32x256xf32> to vector<32x128xf32>
    %46 = arith.maximumf %44, %45 : vector<32x128xf32>
    %c0_23 = arith.constant 0 : index
    %c0_24 = arith.constant 0 : index
    %47 = vector.load %arg5[%c0_23, %c0_24] : memref<1x128xf32, #tpu.memory_space<vmem>>, vector<1x128xf32>
    %48 = vector.broadcast %47 : vector<1x128xf32> to vector<32x128xf32>
    %49 = arith.addf %46, %48 : vector<32x128xf32>
    %cst_25 = arith.constant 0.000000e+00 : f32
    %50 = vector.broadcast %cst_25 : f32 to vector<32x128xf32>
    %51 = arith.maximumf %49, %50 : vector<32x128xf32>
    %52 = vector.extract_strided_slice %19 {offsets = [0, 0], sizes = [32, 128], strides = [1, 1]} : vector<48x128xbf16> to vector<32x128xbf16>
    %c0_26 = arith.constant 0 : index
    %c0_27 = arith.constant 0 : index
    %c0_28 = arith.constant 0 : index
    %53 = vector.load %arg4[%c0_26, %c0_27, %c0_28] : memref<5x128x256xbf16, #tpu.memory_space<vmem>>, vector<1x128x256xbf16>
    %54 = vector.shape_cast %53 : vector<1x128x256xbf16> to vector<128x256xbf16>
    %cst_29 = arith.constant dense<0.000000e+00> : vector<32x256xf32>
    %55 = tpu.matmul %52, %54, %cst_29 {dimension_numbers = #tpu.dot_dimension_numbers<[1], [0], [0], [1], [0, 0, 1, 1], [], []>} : vector<32x128xbf16>, vector<128x256xbf16>, vector<32x256xf32> -> vector<32x256xf32>
    %56 = vector.extract_strided_slice %15 {offsets = [8, 0], sizes = [32, 128], strides = [1, 1]} : vector<48x128xbf16> to vector<32x128xbf16>
    %c1_30 = arith.constant 1 : index
    %c0_31 = arith.constant 0 : index
    %c0_32 = arith.constant 0 : index
    %57 = vector.load %arg4[%c1_30, %c0_31, %c0_32] : memref<5x128x256xbf16, #tpu.memory_space<vmem>>, vector<1x128x256xbf16>
    %58 = vector.shape_cast %57 : vector<1x128x256xbf16> to vector<128x256xbf16>
    %cst_33 = arith.constant dense<0.000000e+00> : vector<32x256xf32>
    %59 = tpu.matmul %56, %58, %cst_33 {dimension_numbers = #tpu.dot_dimension_numbers<[1], [0], [0], [1], [0, 0, 1, 1], [], []>} : vector<32x128xbf16>, vector<128x256xbf16>, vector<32x256xf32> -> vector<32x256xf32>
    %60 = arith.addf %55, %59 : vector<32x256xf32>
    %61 = vector.extract_strided_slice %19 {offsets = [8, 0], sizes = [32, 128], strides = [1, 1]} : vector<48x128xbf16> to vector<32x128xbf16>
    %c2_34 = arith.constant 2 : index
    %c0_35 = arith.constant 0 : index
    %c0_36 = arith.constant 0 : index
    %62 = vector.load %arg4[%c2_34, %c0_35, %c0_36] : memref<5x128x256xbf16, #tpu.memory_space<vmem>>, vector<1x128x256xbf16>
    %63 = vector.shape_cast %62 : vector<1x128x256xbf16> to vector<128x256xbf16>
    %cst_37 = arith.constant dense<0.000000e+00> : vector<32x256xf32>
    %64 = tpu.matmul %61, %63, %cst_37 {dimension_numbers = #tpu.dot_dimension_numbers<[1], [0], [0], [1], [0, 0, 1, 1], [], []>} : vector<32x128xbf16>, vector<128x256xbf16>, vector<32x256xf32> -> vector<32x256xf32>
    %65 = arith.addf %60, %64 : vector<32x256xf32>
    %66 = vector.extract_strided_slice %15 {offsets = [16, 0], sizes = [32, 128], strides = [1, 1]} : vector<48x128xbf16> to vector<32x128xbf16>
    %c3_38 = arith.constant 3 : index
    %c0_39 = arith.constant 0 : index
    %c0_40 = arith.constant 0 : index
    %67 = vector.load %arg4[%c3_38, %c0_39, %c0_40] : memref<5x128x256xbf16, #tpu.memory_space<vmem>>, vector<1x128x256xbf16>
    %68 = vector.shape_cast %67 : vector<1x128x256xbf16> to vector<128x256xbf16>
    %cst_41 = arith.constant dense<0.000000e+00> : vector<32x256xf32>
    %69 = tpu.matmul %66, %68, %cst_41 {dimension_numbers = #tpu.dot_dimension_numbers<[1], [0], [0], [1], [0, 0, 1, 1], [], []>} : vector<32x128xbf16>, vector<128x256xbf16>, vector<32x256xf32> -> vector<32x256xf32>
    %70 = arith.addf %65, %69 : vector<32x256xf32>
    %71 = vector.extract_strided_slice %19 {offsets = [16, 0], sizes = [32, 128], strides = [1, 1]} : vector<48x128xbf16> to vector<32x128xbf16>
    %c4_42 = arith.constant 4 : index
    %c0_43 = arith.constant 0 : index
    %c0_44 = arith.constant 0 : index
    %72 = vector.load %arg4[%c4_42, %c0_43, %c0_44] : memref<5x128x256xbf16, #tpu.memory_space<vmem>>, vector<1x128x256xbf16>
    %73 = vector.shape_cast %72 : vector<1x128x256xbf16> to vector<128x256xbf16>
    %cst_45 = arith.constant dense<0.000000e+00> : vector<32x256xf32>
    %74 = tpu.matmul %71, %73, %cst_45 {dimension_numbers = #tpu.dot_dimension_numbers<[1], [0], [0], [1], [0, 0, 1, 1], [], []>} : vector<32x128xbf16>, vector<128x256xbf16>, vector<32x256xf32> -> vector<32x256xf32>
    %75 = arith.addf %70, %74 : vector<32x256xf32>
    %76 = vector.extract_strided_slice %75 {offsets = [0, 0], sizes = [32, 128], strides = [1, 1]} : vector<32x256xf32> to vector<32x128xf32>
    %77 = vector.extract_strided_slice %75 {offsets = [0, 128], sizes = [32, 128], strides = [1, 1]} : vector<32x256xf32> to vector<32x128xf32>
    %78 = arith.maximumf %76, %77 : vector<32x128xf32>
    %c0_46 = arith.constant 0 : index
    %c0_47 = arith.constant 0 : index
    %79 = vector.load %arg5[%c0_46, %c0_47] : memref<1x128xf32, #tpu.memory_space<vmem>>, vector<1x128xf32>
    %80 = vector.broadcast %79 : vector<1x128xf32> to vector<32x128xf32>
    %81 = arith.addf %78, %80 : vector<32x128xf32>
    %cst_48 = arith.constant 0.000000e+00 : f32
    %82 = vector.broadcast %cst_48 : f32 to vector<32x128xf32>
    %83 = arith.maximumf %81, %82 : vector<32x128xf32>
    %84 = arith.maximumf %51, %83 : vector<32x128xf32>
    %85 = arith.truncf %84 : vector<32x128xf32> to vector<32x128xbf16>
    %86 = vector.extract_strided_slice %85 {offsets = [0, 0], sizes = [8, 128], strides = [1, 1]} : vector<32x128xbf16> to vector<8x128xbf16>
    %c0_49 = arith.constant 0 : index
    %c0_50 = arith.constant 0 : index
    %c0_51 = arith.constant 0 : index
    %87 = vector.load %arg6[%c0_49, %c0_50, %c0_51] : memref<4x128x128xbf16, #tpu.memory_space<vmem>>, vector<1x128x128xbf16>
    %88 = vector.shape_cast %87 : vector<1x128x128xbf16> to vector<128x128xbf16>
    %cst_52 = arith.constant dense<0.000000e+00> : vector<8x128xf32>
    %89 = tpu.matmul %86, %88, %cst_52 {dimension_numbers = #tpu.dot_dimension_numbers<[1], [0], [0], [1], [0, 0, 1, 1], [], []>} : vector<8x128xbf16>, vector<128x128xbf16>, vector<8x128xf32> -> vector<8x128xf32>
    %90 = vector.extract_strided_slice %85 {offsets = [8, 0], sizes = [8, 128], strides = [1, 1]} : vector<32x128xbf16> to vector<8x128xbf16>
    %c1_53 = arith.constant 1 : index
    %c0_54 = arith.constant 0 : index
    %c0_55 = arith.constant 0 : index
    %91 = vector.load %arg6[%c1_53, %c0_54, %c0_55] : memref<4x128x128xbf16, #tpu.memory_space<vmem>>, vector<1x128x128xbf16>
    %92 = vector.shape_cast %91 : vector<1x128x128xbf16> to vector<128x128xbf16>
    %cst_56 = arith.constant dense<0.000000e+00> : vector<8x128xf32>
    %93 = tpu.matmul %90, %92, %cst_56 {dimension_numbers = #tpu.dot_dimension_numbers<[1], [0], [0], [1], [0, 0, 1, 1], [], []>} : vector<8x128xbf16>, vector<128x128xbf16>, vector<8x128xf32> -> vector<8x128xf32>
    %94 = arith.addf %89, %93 : vector<8x128xf32>
    %95 = vector.extract_strided_slice %85 {offsets = [16, 0], sizes = [8, 128], strides = [1, 1]} : vector<32x128xbf16> to vector<8x128xbf16>
    %c2_57 = arith.constant 2 : index
    %c0_58 = arith.constant 0 : index
    %c0_59 = arith.constant 0 : index
    %96 = vector.load %arg6[%c2_57, %c0_58, %c0_59] : memref<4x128x128xbf16, #tpu.memory_space<vmem>>, vector<1x128x128xbf16>
    %97 = vector.shape_cast %96 : vector<1x128x128xbf16> to vector<128x128xbf16>
    %cst_60 = arith.constant dense<0.000000e+00> : vector<8x128xf32>
    %98 = tpu.matmul %95, %97, %cst_60 {dimension_numbers = #tpu.dot_dimension_numbers<[1], [0], [0], [1], [0, 0, 1, 1], [], []>} : vector<8x128xbf16>, vector<128x128xbf16>, vector<8x128xf32> -> vector<8x128xf32>
    %99 = arith.addf %94, %98 : vector<8x128xf32>
    %100 = vector.extract_strided_slice %85 {offsets = [24, 0], sizes = [8, 128], strides = [1, 1]} : vector<32x128xbf16> to vector<8x128xbf16>
    %c3_61 = arith.constant 3 : index
    %c0_62 = arith.constant 0 : index
    %c0_63 = arith.constant 0 : index
    %101 = vector.load %arg6[%c3_61, %c0_62, %c0_63] : memref<4x128x128xbf16, #tpu.memory_space<vmem>>, vector<1x128x128xbf16>
    %102 = vector.shape_cast %101 : vector<1x128x128xbf16> to vector<128x128xbf16>
    %cst_64 = arith.constant dense<0.000000e+00> : vector<8x128xf32>
    %103 = tpu.matmul %100, %102, %cst_64 {dimension_numbers = #tpu.dot_dimension_numbers<[1], [0], [0], [1], [0, 0, 1, 1], [], []>} : vector<8x128xbf16>, vector<128x128xbf16>, vector<8x128xf32> -> vector<8x128xf32>
    %104 = arith.addf %99, %103 : vector<8x128xf32>
    %c0_65 = arith.constant 0 : index
    %c0_66 = arith.constant 0 : index
    %105 = vector.load %arg7[%c0_65, %c0_66] : memref<1x128xf32, #tpu.memory_space<vmem>>, vector<1x128xf32>
    %106 = vector.broadcast %105 : vector<1x128xf32> to vector<8x128xf32>
    %107 = arith.addf %104, %106 : vector<8x128xf32>
    %cst_67 = arith.constant 0.000000e+00 : f32
    %108 = vector.broadcast %cst_67 : f32 to vector<8x128xf32>
    %109 = arith.maximumf %107, %108 : vector<8x128xf32>
    %110 = arith.truncf %109 : vector<8x128xf32> to vector<8x128xbf16>
    %c0_68 = arith.constant 0 : index
    %c0_69 = arith.constant 0 : index
    %111 = vector.load %arg8[%c0_68, %c0_69] : memref<128x128xbf16, #tpu.memory_space<vmem>>, vector<128x128xbf16>
    %cst_70 = arith.constant dense<0.000000e+00> : vector<8x128xf32>
    %112 = tpu.matmul %110, %111, %cst_70 {dimension_numbers = #tpu.dot_dimension_numbers<[1], [0], [0], [1], [0, 0, 1, 1], [], []>} : vector<8x128xbf16>, vector<128x128xbf16>, vector<8x128xf32> -> vector<8x128xf32>
    %c0_71 = arith.constant 0 : index
    %c0_72 = arith.constant 0 : index
    %113 = vector.load %arg9[%c0_71, %c0_72] : memref<1x128xf32, #tpu.memory_space<vmem>>, vector<1x128xf32>
    %114 = vector.broadcast %113 : vector<1x128xf32> to vector<8x128xf32>
    %115 = arith.addf %112, %114 : vector<8x128xf32>
    %c0_73 = arith.constant 0 : index
    %c0_74 = arith.constant 0 : index
    %116 = vector.load %arg10[%c0_73, %c0_74] : memref<8x128xf32, #tpu.memory_space<vmem>>, vector<8x128xf32>
    tpu.vector_store %arg10[%c0_73, %c0_74], %115 {strides = array<i32>} : memref<8x128xf32, #tpu.memory_space<vmem>>, vector<8x128xf32>,
    return
  }
  func.func @transform_0(%arg0: i32) -> (i32, i32, i32) {
    %c0_i32 = arith.constant 0 : i32
    %c0_i32_0 = arith.constant 0 : i32
    %c0_i32_1 = arith.constant 0 : i32
    return %arg0, %c0_i32, %c0_i32_0 : i32, i32, i32
  }
  func.func @transform_1(%arg0: i32) -> (i32, i32) {
    %c0_i32 = arith.constant 0 : i32
    %c0_i32_0 = arith.constant 0 : i32
    %c0_i32_1 = arith.constant 0 : i32
    return %c0_i32, %c0_i32_0 : i32, i32
  }
  func.func @transform_2(%arg0: i32) -> (i32, i32) {
    %c0_i32 = arith.constant 0 : i32
    %c0_i32_0 = arith.constant 0 : i32
    %c0_i32_1 = arith.constant 0 : i32
    return %c0_i32, %c0_i32_0 : i32, i32
  }
  func.func @transform_3(%arg0: i32) -> (i32, i32, i32) {
    %c0_i32 = arith.constant 0 : i32
    %c0_i32_0 = arith.constant 0 : i32
    %c0_i32_1 = arith.constant 0 : i32
    %c0_i32_2 = arith.constant 0 : i32
    return %c0_i32, %c0_i32_0, %c0_i32_1 : i32, i32, i32
  }
  func.func @transform_4(%arg0: i32) -> (i32, i32) {
    %c0_i32 = arith.constant 0 : i32
    %c0_i32_0 = arith.constant 0 : i32
    %c0_i32_1 = arith.constant 0 : i32
    return %c0_i32, %c0_i32_0 : i32, i32
  }
  func.func @transform_5(%arg0: i32) -> (i32, i32, i32) {
    %c0_i32 = arith.constant 0 : i32
    %c0_i32_0 = arith.constant 0 : i32
    %c0_i32_1 = arith.constant 0 : i32
    %c0_i32_2 = arith.constant 0 : i32
    return %c0_i32, %c0_i32_0, %c0_i32_1 : i32, i32, i32
  }
  func.func @transform_6(%arg0: i32) -> (i32, i32) {
    %c0_i32 = arith.constant 0 : i32
    %c0_i32_0 = arith.constant 0 : i32
    %c0_i32_1 = arith.constant 0 : i32
    return %c0_i32, %c0_i32_0 : i32, i32
  }
  func.func @transform_7(%arg0: i32) -> (i32, i32) {
    %c0_i32 = arith.constant 0 : i32
    %c0_i32_0 = arith.constant 0 : i32
    %c0_i32_1 = arith.constant 0 : i32
    return %c0_i32, %c0_i32_0 : i32, i32
  }
  func.func @transform_8(%arg0: i32) -> (i32, i32) {
    %c0_i32 = arith.constant 0 : i32
    %c0_i32_0 = arith.constant 0 : i32
    %c0_i32_1 = arith.constant 0 : i32
    return %c0_i32, %c0_i32_0 : i32, i32
  }
  func.func @transform_9(%arg0: i32) -> (i32, i32) {
    %c0_i32 = arith.constant 0 : i32
    %c0_i32_0 = arith.constant 0 : i32
    return %arg0, %c0_i32 : i32, i32
  }
}

</mosaic_0001>

<llo_original>
// kernel: cnn_forward.1
$region0: #{cnn_forward.1}
  #allocation0 [shape = 'u32[]', space=smem, size = 0x4, offset = 0x4, fixed_abs, tag = 'smem constant byte address 0x4 - core index']
  #allocation1 [shape = 'u32[144,128]{1,0:T(1,128)}', space=vmem, size = 0x12000, scoped, tag = 'internal scratch']
  %s0 = inlined_call_operand.vmem [shape: bf16[1,192,140], index: 0, kind: input, shape index: {}]
  %s1 = inlined_call_operand.vmem [shape: bf16[140,256], index: 1, kind: input, shape index: {}]
  %s2 = inlined_call_operand.vmem [shape: f32[1,128], index: 2, kind: input, shape index: {}]
  %s3 = inlined_call_operand.vmem [shape: bf16[5,128,256], index: 3, kind: input, shape index: {}]
  %s4 = inlined_call_operand.vmem [shape: f32[1,128], index: 4, kind: input, shape index: {}]
  %s5 = inlined_call_operand.vmem [shape: bf16[4,128,128], index: 5, kind: input, shape index: {}]
  %s6 = inlined_call_operand.vmem [shape: f32[1,128], index: 6, kind: input, shape index: {}]
  %s7 = inlined_call_operand.vmem [shape: bf16[128,128], index: 7, kind: input, shape index: {}]
  %s8 = inlined_call_operand.vmem [shape: f32[1,128], index: 8, kind: input, shape index: {}]
  %s9 = inlined_call_operand.vmem [shape: f32[8,128], index: 9, kind: output, shape index: {}]
  %s10 = sld [smem:[#allocation0]]
  $region46: #{cnn_forward.1} parent=0
    _
  %s12 = ssub.s32 1, %s10
  %s13 = scalar_select 0, %s12, %s10
  // Predicated region
  $region2: #{cnn_forward.1} parent=0 // pred_check
    _
  $region3: #{cnn_forward.1} parent=0 // pred_check_branch
    %15 = sbr.rel (0) target = $region5
  $region4: #{cnn_forward.1} parent=0 // pred_region
    _
  $region5: #{cnn_forward.1} parent=0 // pred_fallthru
    _
  // Predicated region
  $region6: #{cnn_forward.1} parent=0 // pred_check
    _
  $region7: #{cnn_forward.1} parent=0 // pred_check_branch
    %17 = sbr.rel (0) target = $region9
  $region8: #{cnn_forward.1} parent=0 // pred_region
    _
  $region9: #{cnn_forward.1} parent=0 // pred_fallthru
    _
  // Predicated region
  $region10: #{cnn_forward.1} parent=0 // pred_check
    _
  $region11: #{cnn_forward.1} parent=0 // pred_check_branch
    %19 = sbr.rel (0) target = $region13
  $region12: #{cnn_forward.1} parent=0 // pred_region
    _
  $region13: #{cnn_forward.1} parent=0 // pred_fallthru
    _
  // Predicated region
  $region14: #{cnn_forward.1} parent=0 // pred_check
    _
  $region15: #{cnn_forward.1} parent=0 // pred_check_branch
    %21 = sbr.rel (0) target = $region17
  $region16: #{cnn_forward.1} parent=0 // pred_region
    _
  $region17: #{cnn_forward.1} parent=0 // pred_fallthru
    _
  // Predicated region
  $region18: #{cnn_forward.1} parent=0 // pred_check
    _
  $region19: #{cnn_forward.1} parent=0 // pred_check_branch
    %23 = sbr.rel (0) target = $region21
  $region20: #{cnn_forward.1} parent=0 // pred_region
    _
  $region21: #{cnn_forward.1} parent=0 // pred_fallthru
    _
  // Predicated region
  $region22: #{cnn_forward.1} parent=0 // pred_check
    _
  $region23: #{cnn_forward.1} parent=0 // pred_check_branch
    %25 = sbr.rel (0) target = $region25
  $region24: #{cnn_forward.1} parent=0 // pred_region
    _
  $region25: #{cnn_forward.1} parent=0 // pred_fallthru
    _
  // Predicated region
  $region26: #{cnn_forward.1} parent=0 // pred_check
    _
  $region27: #{cnn_forward.1} parent=0 // pred_check_branch
    %27 = sbr.rel (0) target = $region29
  $region28: #{cnn_forward.1} parent=0 // pred_region
    _
  $region29: #{cnn_forward.1} parent=0 // pred_fallthru
    _
  // Predicated region
  $region30: #{cnn_forward.1} parent=0 // pred_check
    _
  $region31: #{cnn_forward.1} parent=0 // pred_check_branch
    %29 = sbr.rel (0) target = $region33
  $region32: #{cnn_forward.1} parent=0 // pred_region
    _
  $region33: #{cnn_forward.1} parent=0 // pred_fallthru
    _
  // Predicated region
  $region34: #{cnn_forward.1} parent=0 // pred_check
    _
  $region35: #{cnn_forward.1} parent=0 // pred_check_branch
    %31 = sbr.rel (0) target = $region37
  $region36: #{cnn_forward.1} parent=0 // pred_region
    _
  $region37: #{cnn_forward.1} parent=0 // pred_fallthru
    _
  %v33 = vld [vmem:[%s0] sm:$0xff]
  %v34 = vld [vmem:[%s0 + $0x8] sm:$0xff]
  %v35 = vld [vmem:[%s0 + $0x10] sm:$0xff]
  %v36 = vld [vmem:[%s0 + $0x18] sm:$0xff]
  %v37 = vld [vmem:[%s0 + $0x20] sm:$0xff]
  %v38 = vld [vmem:[%s0 + $0x28] sm:$0xff]
  %v39 = vld [vmem:[%s0 + $0x30] sm:$0xff]
  %v40 = vld [vmem:[%s0 + $0x38] sm:$0xff]
  %v41 = vld [vmem:[%s0 + $0x40] sm:$0xff]
  %v42 = vld [vmem:[%s0 + $0x48] sm:$0xff]
  %v43 = vld [vmem:[%s0 + $0x50] sm:$0xff]
  %v44 = vld [vmem:[%s0 + $0x58] sm:$0xff]
  %v45 = vld [vmem:[%s0 + $0x60] sm:$0xff]
  %v46 = vld [vmem:[%s0 + $0x68] sm:$0xff]
  %v47 = vld [vmem:[%s0 + $0x70] sm:$0xff]
  %v48 = vld [vmem:[%s0 + $0x78] sm:$0xff]
  %v49 = vld [vmem:[%s0 + $0x80] sm:$0xff]
  %v50 = vld [vmem:[%s0 + $0x88] sm:$0xff]
  %v51 = vld [vmem:[%s0 + $0x90] sm:$0xff]
  %v52 = vld [vmem:[%s0 + $0x98] sm:$0xff]
  %v53 = vld [vmem:[%s0 + $0xa0] sm:$0xff]
  %v54 = vld [vmem:[%s0 + $0xa8] sm:$0xff]
  %v55 = vld [vmem:[%s0 + $0xb0] sm:$0xff]
  %v56 = vld [vmem:[%s0 + $0xb8] sm:$0xff]
  %v57 = vld [vmem:[%s1] sm:$0xff]
  %v58 = vld [vmem:[%s1 + $0x8] sm:$0xff]
  %v59 = vld [vmem:[%s1 + $0x10] sm:$0xff]
  %v60 = vld [vmem:[%s1 + $0x18] sm:$0xff]
  %v61 = vld [vmem:[%s1 + $0x20] sm:$0xff]
  %v62 = vld [vmem:[%s1 + $0x28] sm:$0xff]
  %v63 = vld [vmem:[%s1 + $0x30] sm:$0xff]
  %v64 = vld [vmem:[%s1 + $0x38] sm:$0xff]
  %v65 = vld [vmem:[%s1 + $0x40] sm:$0xff]
  %v66 = vld [vmem:[%s1 + $0x48] sm:$0xff]
  %v67 = vld [vmem:[%s1 + $0x50] sm:$0xff]
  %v68 = vld [vmem:[%s1 + $0x58] sm:$0xff]
  %v69 = vld [vmem:[%s1 + $0x60] sm:$0xff]
  %v70 = vld [vmem:[%s1 + $0x68] sm:$0xff]
  %v71 = vld [vmem:[%s1 + $0x70] sm:$0xff]
  %v72 = vld [vmem:[%s1 + $0x78] sm:$0xff]
  %v73 = vld [vmem:[%s1 + $0x80] sm:$0xff]
  %v74 = vld [vmem:[%s1 + $0x88] sm:$0x33]
  %v99 = vunpack.c.l.b16 %v33
  %v100 = vunpack.c.h.b16 %v33
  %v101 = vunpack.c.l.b16 %v34
  %v102 = vunpack.c.h.b16 %v34
  %v103 = vunpack.c.l.b16 %v35
  %v104 = vunpack.c.h.b16 %v35
  %v105 = vunpack.c.l.b16 %v36
  %v106 = vunpack.c.h.b16 %v36
  %v107 = vunpack.c.l.b16 %v37
  %v108 = vunpack.c.h.b16 %v37
  %v109 = vunpack.c.l.b16 %v38
  %v110 = vunpack.c.h.b16 %v38
  %v111 = vunpack.c.l.b16 %v39
  %v112 = vunpack.c.h.b16 %v39
  %v113 = vunpack.c.l.b16 %v40
  %v114 = vunpack.c.h.b16 %v40
  %v115 = vunpack.c.l.b16 %v41
  %v116 = vunpack.c.h.b16 %v41
  %v117 = vunpack.c.l.b16 %v42
  %v118 = vunpack.c.h.b16 %v42
  %v119 = vunpack.c.l.b16 %v43
  %v120 = vunpack.c.h.b16 %v43
  %v121 = vunpack.c.l.b16 %v44
  %v122 = vunpack.c.h.b16 %v44
  %v123 = vunpack.c.l.b16 %v45
  %v124 = vunpack.c.h.b16 %v45
  %v125 = vunpack.c.l.b16 %v46
  %v126 = vunpack.c.h.b16 %v46
  %v127 = vunpack.c.l.b16 %v47
  %v128 = vunpack.c.h.b16 %v47
  %v129 = vunpack.c.l.b16 %v48
  %v130 = vunpack.c.h.b16 %v48
  %v131 = vunpack.c.l.b16 %v49
  %v132 = vunpack.c.h.b16 %v49
  %v133 = vunpack.c.l.b16 %v50
  %v134 = vunpack.c.h.b16 %v50
  %v135 = vunpack.c.l.b16 %v51
  %v136 = vunpack.c.h.b16 %v51
  %v137 = vunpack.c.l.b16 %v52
  %v138 = vunpack.c.h.b16 %v52
  %v139 = vunpack.c.l.b16 %v53
  %v140 = vunpack.c.h.b16 %v53
  %v141 = vunpack.c.l.b16 %v54
  %v142 = vunpack.c.h.b16 %v54
  %v143 = vunpack.c.l.b16 %v55
  %v144 = vunpack.c.h.b16 %v55
  %v145 = vunpack.c.l.b16 %v56
  %v146 = vunpack.c.h.b16 %v56
  %v147 = vpack.c.b16 %v101, %v99
  %v148 = vpack.c.b16 %v102, %v100
  %v149 = vpack.c.b16 %v105, %v103
  %v150 = vpack.c.b16 %v106, %v104
  %v151 = vpack.c.b16 %v109, %v107
  %v152 = vpack.c.b16 %v110, %v108
  %v153 = vpack.c.b16 %v113, %v111
  %v154 = vpack.c.b16 %v114, %v112
  %v155 = vpack.c.b16 %v117, %v115
  %v156 = vpack.c.b16 %v118, %v116
  %v157 = vpack.c.b16 %v121, %v119
  %v158 = vpack.c.b16 %v122, %v120
  %v159 = vpack.c.b16 %v125, %v123
  %v160 = vpack.c.b16 %v126, %v124
  %v161 = vpack.c.b16 %v129, %v127
  %v162 = vpack.c.b16 %v130, %v128
  %v163 = vpack.c.b16 %v133, %v131
  %v164 = vpack.c.b16 %v134, %v132
  %v165 = vpack.c.b16 %v137, %v135
  %v166 = vpack.c.b16 %v138, %v136
  %v167 = vpack.c.b16 %v141, %v139
  %v168 = vpack.c.b16 %v142, %v140
  %v169 = vpack.c.b16 %v145, %v143
  %v170 = vpack.c.b16 %v146, %v144
  %v201 = vunpack.c.l.b16 %v57
  %v202 = vunpack.c.h.b16 %v57
  %v203 = vunpack.c.l.b16 %v58
  %v204 = vunpack.c.h.b16 %v58
  %v205 = vunpack.c.l.b16 %v59
  %v206 = vunpack.c.h.b16 %v59
  %v207 = vunpack.c.l.b16 %v60
  %v208 = vunpack.c.h.b16 %v60
  %v209 = vunpack.c.l.b16 %v61
  %v210 = vunpack.c.h.b16 %v61
  %v211 = vunpack.c.l.b16 %v62
  %v212 = vunpack.c.h.b16 %v62
  %v213 = vunpack.c.l.b16 %v63
  %v214 = vunpack.c.h.b16 %v63
  %v215 = vunpack.c.l.b16 %v64
  %v216 = vunpack.c.h.b16 %v64
  %v217 = vunpack.c.l.b16 %v65
  %v218 = vunpack.c.h.b16 %v65
  %v219 = vunpack.c.l.b16 %v66
  %v220 = vunpack.c.h.b16 %v66
  %v221 = vunpack.c.l.b16 %v67
  %v222 = vunpack.c.h.b16 %v67
  %v223 = vunpack.c.l.b16 %v68
  %v224 = vunpack.c.h.b16 %v68
  %v225 = vunpack.c.l.b16 %v69
  %v226 = vunpack.c.h.b16 %v69
  %v227 = vunpack.c.l.b16 %v70
  %v228 = vunpack.c.h.b16 %v70
  %v229 = vunpack.c.l.b16 %v71
  %v230 = vunpack.c.h.b16 %v71
  %v231 = vunpack.c.l.b16 %v72
  %v232 = vunpack.c.h.b16 %v72
  %v233 = vunpack.c.l.b16 %v73
  %v234 = vunpack.c.h.b16 %v73
  %v235 = vunpack.c.l.b16 %v74
  %v236 = vunpack.c.h.b16 %v74
  %v237 = vpack.c.b16 %v203, %v201
  %v238 = vpack.c.b16 %v204, %v202
  %v239 = vpack.c.b16 %v207, %v205
  %v240 = vpack.c.b16 %v208, %v206
  %v241 = vpack.c.b16 %v211, %v209
  %v242 = vpack.c.b16 %v212, %v210
  %v243 = vpack.c.b16 %v215, %v213
  %v244 = vpack.c.b16 %v216, %v214
  %v245 = vpack.c.b16 %v219, %v217
  %v246 = vpack.c.b16 %v220, %v218
  %v247 = vpack.c.b16 %v223, %v221
  %v248 = vpack.c.b16 %v224, %v222
  %v249 = vpack.c.b16 %v227, %v225
  %v250 = vpack.c.b16 %v228, %v226
  %v251 = vpack.c.b16 %v231, %v229
  %v252 = vpack.c.b16 %v232, %v230
  %v253 = vpack.c.b16 %v235, %v233
  %v254 = vpack.c.b16 %v236, %v234
  %vm271 = vcmask 97280
  %v273 = vsel %vm271, %v148, 0
  %v276 = vsel %vm271, %v150, 0
  %v279 = vsel %vm271, %v152, 0
  %v282 = vsel %vm271, %v154, 0
  %v285 = vsel %vm271, %v156, 0
  %v288 = vsel %vm271, %v158, 0
  %v291 = vsel %vm271, %v160, 0
  %v294 = vsel %vm271, %v162, 0
  %v297 = vsel %vm271, %v164, 0
  %v300 = vsel %vm271, %v166, 0
  %v303 = vsel %vm271, %v168, 0
  %v306 = vsel %vm271, %v170, 0
  %vm308 = vcmask 1045504
  %v310 = vsel %vm308, %v253, 0
  %v313 = vsel %vm308, %v254, 0
  %315 = vmatprep.subr.bf16.mxu0 %v238
  %316 = vmatpush1.bf16.msra.mxu0 %v237
  %317 = vmatprep.subr.bf16.mxu0 %v240
  %318 = vmatpush1.bf16.msra.mxu0 %v239
  %319 = vmatprep.subr.bf16.mxu0 %v242
  %320 = vmatpush1.bf16.msra.mxu0 %v241
  %321 = vmatprep.subr.bf16.mxu0 %v244
  %322 = vmatpush1.bf16.msra.mxu0 %v243
  %323 = vmatprep.subr.bf16.mxu0 %v246
  %324 = vmatpush1.bf16.msra.mxu0 %v245
  %325 = vmatprep.subr.bf16.mxu0 %v248
  %326 = vmatpush1.bf16.msra.mxu0 %v247
  %327 = vmatprep.subr.bf16.mxu0 %v250
  %328 = vmatpush1.bf16.msra.mxu0 %v249
  %329 = vmatprep.subr.bf16.mxu0 %v252
  %330 = vmatpush1.bf16.msra.mxu0 %v251
  %331 = vmatprep.subr.bf16.mxu0 %v313
  %332 = vmatpush1.bf16.msra.mxu0 %v310
  %333 = vmatprep.subr.bf16.mxu0 0
  %334 = vmatpush1.bf16.msra.mxu0 0
  %335 = vmatprep.subr.bf16.mxu0 0
  %336 = vmatpush1.bf16.msra.mxu0 0
  %337 = vmatprep.subr.bf16.mxu0 0
  %338 = vmatpush1.bf16.msra.mxu0 0
  %339 = vmatprep.subr.bf16.mxu0 0
  %340 = vmatpush1.bf16.msra.mxu0 0
  %341 = vmatprep.subr.bf16.mxu0 0
  %342 = vmatpush1.bf16.msra.mxu0 0
  %343 = vmatprep.subr.bf16.mxu0 0
  %344 = vmatpush1.bf16.msra.mxu0 0
  %345 = vmatprep.subr.bf16.mxu0 0
  %346 = vmatpush1.bf16.msra.mxu0 0
  %347 = vmatprep.mubr.bf16.mxu0 %v273
  %348 = vmatmul.mubr.bf16.gmra.mrb[0].mxu0 %v147
  %v349 = vpop.f32.mrb[0].mxu0
  %v350 = vadd.f32 0.0, %v349
  %v351 = vpop.f32.mrb[0].mxu0
  %v352 = vadd.f32 0.0, %v351
  %v353 = vpop.f32.mrb[0].mxu0
  %v354 = vadd.f32 0.0, %v353
  %v355 = vpop.f32.mrb[0].mxu0
  %v356 = vadd.f32 0.0, %v355
  %357 = vmatprep.mubr.bf16.mxu0 %v276
  %358 = vmatmul.mubr.bf16.gmra.mrb[0].mxu0 %v149
  %v359 = vpop.f32.mrb[0].mxu0
  %v360 = vadd.f32 0.0, %v359
  %v361 = vpop.f32.mrb[0].mxu0
  %v362 = vadd.f32 0.0, %v361
  %v363 = vpop.f32.mrb[0].mxu0
  %v364 = vadd.f32 0.0, %v363
  %v365 = vpop.f32.mrb[0].mxu0
  %v366 = vadd.f32 0.0, %v365
  %367 = vmatprep.mubr.bf16.mxu0 %v279
  %368 = vmatmul.mubr.bf16.gmra.mrb[0].mxu0 %v151
  %v369 = vpop.f32.mrb[0].mxu0
  %v370 = vadd.f32 0.0, %v369
  %v371 = vpop.f32.mrb[0].mxu0
  %v372 = vadd.f32 0.0, %v371
  %v373 = vpop.f32.mrb[0].mxu0
  %v374 = vadd.f32 0.0, %v373
  %v375 = vpop.f32.mrb[0].mxu0
  %v376 = vadd.f32 0.0, %v375
  %377 = vmatprep.mubr.bf16.mxu0 %v282
  %378 = vmatmul.mubr.bf16.gmra.mrb[0].mxu0 %v153
  %v379 = vpop.f32.mrb[0].mxu0
  %v380 = vadd.f32 0.0, %v379
  %v381 = vpop.f32.mrb[0].mxu0
  %v382 = vadd.f32 0.0, %v381
  %v383 = vpop.f32.mrb[0].mxu0
  %v384 = vadd.f32 0.0, %v383
  %v385 = vpop.f32.mrb[0].mxu0
  %v386 = vadd.f32 0.0, %v385
  %387 = vmatprep.mubr.bf16.mxu0 %v285
  %388 = vmatmul.mubr.bf16.gmra.mrb[0].mxu0 %v155
  %v389 = vpop.f32.mrb[0].mxu0
  %v390 = vadd.f32 0.0, %v389
  %v391 = vpop.f32.mrb[0].mxu0
  %v392 = vadd.f32 0.0, %v391
  %v393 = vpop.f32.mrb[0].mxu0
  %v394 = vadd.f32 0.0, %v393
  %v395 = vpop.f32.mrb[0].mxu0
  %v396 = vadd.f32 0.0, %v395
  %397 = vmatprep.mubr.bf16.mxu0 %v288
  %398 = vmatmul.mubr.bf16.gmra.mrb[0].mxu0 %v157
  %v399 = vpop.f32.mrb[0].mxu0
  %v400 = vadd.f32 0.0, %v399
  %v401 = vpop.f32.mrb[0].mxu0
  %v402 = vadd.f32 0.0, %v401
  %v403 = vpop.f32.mrb[0].mxu0
  %v404 = vadd.f32 0.0, %v403
  %v405 = vpop.f32.mrb[0].mxu0
  %v406 = vadd.f32 0.0, %v405
  %407 = vmatprep.mubr.bf16.mxu0 %v291
  %408 = vmatmul.mubr.bf16.gmra.mrb[0].mxu0 %v159
  %v409 = vpop.f32.mrb[0].mxu0
  %v410 = vadd.f32 0.0, %v409
  %v411 = vpop.f32.mrb[0].mxu0
  %v412 = vadd.f32 0.0, %v411
  %v413 = vpop.f32.mrb[0].mxu0
  %v414 = vadd.f32 0.0, %v413
  %v415 = vpop.f32.mrb[0].mxu0
  %v416 = vadd.f32 0.0, %v415
  %417 = vmatprep.mubr.bf16.mxu0 %v294
  %418 = vmatmul.mubr.bf16.gmra.mrb[0].mxu0 %v161
  %v419 = vpop.f32.mrb[0].mxu0
  %v420 = vadd.f32 0.0, %v419
  %v421 = vpop.f32.mrb[0].mxu0
  %v422 = vadd.f32 0.0, %v421
  %v423 = vpop.f32.mrb[0].mxu0
  %v424 = vadd.f32 0.0, %v423
  %v425 = vpop.f32.mrb[0].mxu0
  %v426 = vadd.f32 0.0, %v425
  %427 = vmatprep.mubr.bf16.mxu0 %v297
  %428 = vmatmul.mubr.bf16.gmra.mrb[0].mxu0 %v163
  %v429 = vpop.f32.mrb[0].mxu0
  %v430 = vadd.f32 0.0, %v429
  %v431 = vpop.f32.mrb[0].mxu0
  %v432 = vadd.f32 0.0, %v431
  %v433 = vpop.f32.mrb[0].mxu0
  %v434 = vadd.f32 0.0, %v433
  %v435 = vpop.f32.mrb[0].mxu0
  %v436 = vadd.f32 0.0, %v435
  %437 = vmatprep.mubr.bf16.mxu0 %v300
  %438 = vmatmul.mubr.bf16.gmra.mrb[0].mxu0 %v165
  %v439 = vpop.f32.mrb[0].mxu0
  %v440 = vadd.f32 0.0, %v439
  %v441 = vpop.f32.mrb[0].mxu0
  %v442 = vadd.f32 0.0, %v441
  %v443 = vpop.f32.mrb[0].mxu0
  %v444 = vadd.f32 0.0, %v443
  %v445 = vpop.f32.mrb[0].mxu0
  %v446 = vadd.f32 0.0, %v445
  %447 = vmatprep.mubr.bf16.mxu0 %v303
  %448 = vmatmul.mubr.bf16.gmra.mrb[0].mxu0 %v167
  %v449 = vpop.f32.mrb[0].mxu0
  %v450 = vadd.f32 0.0, %v449
  %v451 = vpop.f32.mrb[0].mxu0
  %v452 = vadd.f32 0.0, %v451
  %v453 = vpop.f32.mrb[0].mxu0
  %v454 = vadd.f32 0.0, %v453
  %v455 = vpop.f32.mrb[0].mxu0
  %v456 = vadd.f32 0.0, %v455
  %457 = vmatprep.mubr.bf16.mxu0 %v306
  %458 = vmatmul.mubr.bf16.gmra.mrb[0].mxu0 %v169
  %v459 = vpop.f32.mrb[0].mxu0
  %v460 = vadd.f32 0.0, %v459
  %v461 = vpop.f32.mrb[0].mxu0
  %v462 = vadd.f32 0.0, %v461
  %v463 = vpop.f32.mrb[0].mxu0
  %v464 = vadd.f32 0.0, %v463
  %v465 = vpop.f32.mrb[0].mxu0
  %v466 = vadd.f32 0.0, %v465
  %467 = vdwg.mxu0
  %v468 = vmax.f32 %v350, %v352
  %v469 = vmax.f32 %v354, %v356
  %v470 = vmax.f32 %v360, %v362
  %v471 = vmax.f32 %v364, %v366
  %v472 = vmax.f32 %v370, %v372
  %v473 = vmax.f32 %v374, %v376
  %v474 = vmax.f32 %v380, %v382
  %v475 = vmax.f32 %v384, %v386
  %v476 = vmax.f32 %v390, %v392
  %v477 = vmax.f32 %v394, %v396
  %v478 = vmax.f32 %v400, %v402
  %v479 = vmax.f32 %v404, %v406
  %v480 = vmax.f32 %v410, %v412
  %v481 = vmax.f32 %v414, %v416
  %v482 = vmax.f32 %v420, %v422
  %v483 = vmax.f32 %v424, %v426
  %v484 = vmax.f32 %v430, %v432
  %v485 = vmax.f32 %v434, %v436
  %v486 = vmax.f32 %v440, %v442
  %v487 = vmax.f32 %v444, %v446
  %v488 = vmax.f32 %v450, %v452
  %v489 = vmax.f32 %v454, %v456
  %v490 = vmax.f32 %v460, %v462
  %v491 = vmax.f32 %v464, %v466
  %v492 = vld [vmem:[%s2] sm:$0x1]
  %v494 = vlaneseq
  %v495 = vshrl.u32 %v494, 7
  %v496 = vsub.s32 0, %v495
  %v497 = vrot.slane %v492, %v496
  %v499 = vadd.f32 %v468, %v497
  %v500 = vadd.f32 %v469, %v497
  %v501 = vadd.f32 %v470, %v497
  %v502 = vadd.f32 %v471, %v497
  %v503 = vadd.f32 %v472, %v497
  %v504 = vadd.f32 %v473, %v497
  %v505 = vadd.f32 %v474, %v497
  %v506 = vadd.f32 %v475, %v497
  %v507 = vadd.f32 %v476, %v497
  %v508 = vadd.f32 %v477, %v497
  %v509 = vadd.f32 %v478, %v497
  %v510 = vadd.f32 %v479, %v497
  %v511 = vadd.f32 %v480, %v497
  %v512 = vadd.f32 %v481, %v497
  %v513 = vadd.f32 %v482, %v497
  %v514 = vadd.f32 %v483, %v497
  %v515 = vadd.f32 %v484, %v497
  %v516 = vadd.f32 %v485, %v497
  %v517 = vadd.f32 %v486, %v497
  %v518 = vadd.f32 %v487, %v497
  %v519 = vadd.f32 %v488, %v497
  %v520 = vadd.f32 %v489, %v497
  %v521 = vadd.f32 %v490, %v497
  %v522 = vadd.f32 %v491, %v497
  %v523 = vmax.f32 %v499, 0.0
  %v524 = vmax.f32 %v500, 0.0
  %v525 = vmax.f32 %v501, 0.0
  %v526 = vmax.f32 %v502, 0.0
  %v527 = vmax.f32 %v503, 0.0
  %v528 = vmax.f32 %v504, 0.0
  %v529 = vmax.f32 %v505, 0.0
  %v530 = vmax.f32 %v506, 0.0
  %v531 = vmax.f32 %v507, 0.0
  %v532 = vmax.f32 %v508, 0.0
  %v533 = vmax.f32 %v509, 0.0
  %v534 = vmax.f32 %v510, 0.0
  %v535 = vmax.f32 %v511, 0.0
  %v536 = vmax.f32 %v512, 0.0
  %v537 = vmax.f32 %v513, 0.0
  %v538 = vmax.f32 %v514, 0.0
  %v539 = vmax.f32 %v515, 0.0
  %v540 = vmax.f32 %v516, 0.0
  %v541 = vmax.f32 %v517, 0.0
  %v542 = vmax.f32 %v518, 0.0
  %v543 = vmax.f32 %v519, 0.0
  %v544 = vmax.f32 %v520, 0.0
  %v545 = vmax.f32 %v521, 0.0
  %v546 = vmax.f32 %v522, 0.0
  %v547 = vmax.f32 %v523, %v529
  %v548 = vmax.f32 %v524, %v530
  %v549 = vmax.f32 %v525, %v531
  %v550 = vmax.f32 %v526, %v532
  %v551 = vmax.f32 %v527, %v533
  %v552 = vmax.f32 %v528, %v534
  %v553 = vpack.c.bf16 %v548, %v547
  %v554 = vpack.c.bf16 %v550, %v549
  %v555 = vpack.c.bf16 %v552, %v551
  %v556 = vmax.f32 %v535, %v541
  %v557 = vmax.f32 %v536, %v542
  %v558 = vmax.f32 %v537, %v543
  %v559 = vmax.f32 %v538, %v544
  %v560 = vmax.f32 %v539, %v545
  %v561 = vmax.f32 %v540, %v546
  %v562 = vpack.c.bf16 %v557, %v556
  %v563 = vpack.c.bf16 %v559, %v558
  %v564 = vpack.c.bf16 %v561, %v560
  %v565 = vld [vmem:[%s3] sm:$0xff]
  %v566 = vld [vmem:[%s3 + $0x8] sm:$0xff]
  %v567 = vld [vmem:[%s3 + $0x10] sm:$0xff]
  %v568 = vld [vmem:[%s3 + $0x18] sm:$0xff]
  %v569 = vld [vmem:[%s3 + $0x20] sm:$0xff]
  %v570 = vld [vmem:[%s3 + $0x28] sm:$0xff]
  %v571 = vld [vmem:[%s3 + $0x30] sm:$0xff]
  %v572 = vld [vmem:[%s3 + $0x38] sm:$0xff]
  %v573 = vld [vmem:[%s3 + $0x40] sm:$0xff]
  %v574 = vld [vmem:[%s3 + $0x48] sm:$0xff]
  %v575 = vld [vmem:[%s3 + $0x50] sm:$0xff]
  %v576 = vld [vmem:[%s3 + $0x58] sm:$0xff]
  %v577 = vld [vmem:[%s3 + $0x60] sm:$0xff]
  %v578 = vld [vmem:[%s3 + $0x68] sm:$0xff]
  %v579 = vld [vmem:[%s3 + $0x70] sm:$0xff]
  %v580 = vld [vmem:[%s3 + $0x78] sm:$0xff]
  %s581 = scalar_lea.vmem %s3, 128
  %v582 = vld [vmem:[%s581] sm:$0xff]
  %v583 = vld [vmem:[%s581 + $0x8] sm:$0xff]
  %v584 = vld [vmem:[%s581 + $0x10] sm:$0xff]
  %v585 = vld [vmem:[%s581 + $0x18] sm:$0xff]
  %v586 = vld [vmem:[%s581 + $0x20] sm:$0xff]
  %v587 = vld [vmem:[%s581 + $0x28] sm:$0xff]
  %v588 = vld [vmem:[%s581 + $0x30] sm:$0xff]
  %v589 = vld [vmem:[%s581 + $0x38] sm:$0xff]
  %v590 = vld [vmem:[%s581 + $0x40] sm:$0xff]
  %v591 = vld [vmem:[%s581 + $0x48] sm:$0xff]
  %v592 = vld [vmem:[%s581 + $0x50] sm:$0xff]
  %v593 = vld [vmem:[%s581 + $0x58] sm:$0xff]
  %v594 = vld [vmem:[%s581 + $0x60] sm:$0xff]
  %v595 = vld [vmem:[%s581 + $0x68] sm:$0xff]
  %v596 = vld [vmem:[%s581 + $0x70] sm:$0xff]
  %v597 = vld [vmem:[%s581 + $0x78] sm:$0xff]
  %v614 = vunpack.c.l.b16 %v582
  %v615 = vunpack.c.h.b16 %v582
  %v616 = vunpack.c.l.b16 %v583
  %v617 = vunpack.c.h.b16 %v583
  %v618 = vunpack.c.l.b16 %v584
  %v619 = vunpack.c.h.b16 %v584
  %v620 = vunpack.c.l.b16 %v585
  %v621 = vunpack.c.h.b16 %v585
  %v622 = vunpack.c.l.b16 %v586
  %v623 = vunpack.c.h.b16 %v586
  %v624 = vunpack.c.l.b16 %v587
  %v625 = vunpack.c.h.b16 %v587
  %v626 = vunpack.c.l.b16 %v588
  %v627 = vunpack.c.h.b16 %v588
  %v628 = vunpack.c.l.b16 %v589
  %v629 = vunpack.c.h.b16 %v589
  %v630 = vunpack.c.l.b16 %v590
  %v631 = vunpack.c.h.b16 %v590
  %v632 = vunpack.c.l.b16 %v591
  %v633 = vunpack.c.h.b16 %v591
  %v634 = vunpack.c.l.b16 %v592
  %v635 = vunpack.c.h.b16 %v592
  %v636 = vunpack.c.l.b16 %v593
  %v637 = vunpack.c.h.b16 %v593
  %v638 = vunpack.c.l.b16 %v594
  %v639 = vunpack.c.h.b16 %v594
  %v640 = vunpack.c.l.b16 %v595
  %v641 = vunpack.c.h.b16 %v595
  %v642 = vunpack.c.l.b16 %v596
  %v643 = vunpack.c.h.b16 %v596
  %v644 = vunpack.c.l.b16 %v597
  %v645 = vunpack.c.h.b16 %v597
  %v646 = vpack.c.b16 %v616, %v614
  %v647 = vpack.c.b16 %v617, %v615
  %v648 = vpack.c.b16 %v620, %v618
  %v649 = vpack.c.b16 %v621, %v619
  %v650 = vpack.c.b16 %v624, %v622
  %v651 = vpack.c.b16 %v625, %v623
  %v652 = vpack.c.b16 %v628, %v626
  %v653 = vpack.c.b16 %v629, %v627
  %v654 = vpack.c.b16 %v632, %v630
  %v655 = vpack.c.b16 %v633, %v631
  %v656 = vpack.c.b16 %v636, %v634
  %v657 = vpack.c.b16 %v637, %v635
  %v658 = vpack.c.b16 %v640, %v638
  %v659 = vpack.c.b16 %v641, %v639
  %v660 = vpack.c.b16 %v644, %v642
  %v661 = vpack.c.b16 %v645, %v643
  %678 = vmatprep.subr.bf16.mxu0 %v647
  %679 = vmatpush1.bf16.msra.mxu0 %v646
  %680 = vmatprep.subr.bf16.mxu0 %v649
  %681 = vmatpush1.bf16.msra.mxu0 %v648
  %682 = vmatprep.subr.bf16.mxu0 %v651
  %683 = vmatpush1.bf16.msra.mxu0 %v650
  %684 = vmatprep.subr.bf16.mxu0 %v653
  %685 = vmatpush1.bf16.msra.mxu0 %v652
  %686 = vmatprep.subr.bf16.mxu0 %v655
  %687 = vmatpush1.bf16.msra.mxu0 %v654
  %688 = vmatprep.subr.bf16.mxu0 %v657
  %689 = vmatpush1.bf16.msra.mxu0 %v656
  %690 = vmatprep.subr.bf16.mxu0 %v659
  %691 = vmatpush1.bf16.msra.mxu0 %v658
  %692 = vmatprep.subr.bf16.mxu0 %v661
  %693 = vmatpush1.bf16.msra.mxu0 %v660
  %694 = vmatprep.subr.bf16.mxu0 0
  %695 = vmatpush1.bf16.msra.mxu0 0
  %696 = vmatprep.subr.bf16.mxu0 0
  %697 = vmatpush1.bf16.msra.mxu0 0
  %698 = vmatprep.subr.bf16.mxu0 0
  %699 = vmatpush1.bf16.msra.mxu0 0
  %700 = vmatprep.subr.bf16.mxu0 0
  %701 = vmatpush1.bf16.msra.mxu0 0
  %702 = vmatprep.subr.bf16.mxu0 0
  %703 = vmatpush1.bf16.msra.mxu0 0
  %704 = vmatprep.subr.bf16.mxu0 0
  %705 = vmatpush1.bf16.msra.mxu0 0
  %706 = vmatprep.subr.bf16.mxu0 0
  %707 = vmatpush1.bf16.msra.mxu0 0
  %708 = vmatprep.subr.bf16.mxu0 0
  %709 = vmatpush1.bf16.msra.mxu0 0
  %710 = vmatprep.mubr.bf16.mxu0 0
  %711 = vmatmul.mubr.bf16.gmra.mrb[0].mxu0 %v562
  %v712 = vpop.f32.mrb[0].mxu0
  %v713 = vadd.f32 0.0, %v712
  %v714 = vpop.f32.mrb[0].mxu0
  %v715 = vadd.f32 0.0, %v714
  %v716 = vpop.f32.mrb[0].mxu0
  %v717 = vadd.f32 0.0, %v716
  %v718 = vpop.f32.mrb[0].mxu0
  %v719 = vadd.f32 0.0, %v718
  %720 = vmatprep.mubr.bf16.mxu0 0
  %721 = vmatmul.mubr.bf16.gmra.mrb[0].mxu0 %v563
  %v722 = vpop.f32.mrb[0].mxu0
  %v723 = vadd.f32 0.0, %v722
  %v724 = vpop.f32.mrb[0].mxu0
  %v725 = vadd.f32 0.0, %v724
  %v726 = vpop.f32.mrb[0].mxu0
  %v727 = vadd.f32 0.0, %v726
  %v728 = vpop.f32.mrb[0].mxu0
  %v729 = vadd.f32 0.0, %v728
  %730 = vdwg.mxu0
  %v747 = vunpack.c.l.b16 %v565
  %v748 = vunpack.c.h.b16 %v565
  %v749 = vunpack.c.l.b16 %v566
  %v750 = vunpack.c.h.b16 %v566
  %v751 = vunpack.c.l.b16 %v567
  %v752 = vunpack.c.h.b16 %v567
  %v753 = vunpack.c.l.b16 %v568
  %v754 = vunpack.c.h.b16 %v568
  %v755 = vunpack.c.l.b16 %v569
  %v756 = vunpack.c.h.b16 %v569
  %v757 = vunpack.c.l.b16 %v570
  %v758 = vunpack.c.h.b16 %v570
  %v759 = vunpack.c.l.b16 %v571
  %v760 = vunpack.c.h.b16 %v571
  %v761 = vunpack.c.l.b16 %v572
  %v762 = vunpack.c.h.b16 %v572
  %v763 = vunpack.c.l.b16 %v573
  %v764 = vunpack.c.h.b16 %v573
  %v765 = vunpack.c.l.b16 %v574
  %v766 = vunpack.c.h.b16 %v574
  %v767 = vunpack.c.l.b16 %v575
  %v768 = vunpack.c.h.b16 %v575
  %v769 = vunpack.c.l.b16 %v576
  %v770 = vunpack.c.h.b16 %v576
  %v771 = vunpack.c.l.b16 %v577
  %v772 = vunpack.c.h.b16 %v577
  %v773 = vunpack.c.l.b16 %v578
  %v774 = vunpack.c.h.b16 %v578
  %v775 = vunpack.c.l.b16 %v579
  %v776 = vunpack.c.h.b16 %v579
  %v777 = vunpack.c.l.b16 %v580
  %v778 = vunpack.c.h.b16 %v580
  %v779 = vpack.c.b16 %v749, %v747
  %v780 = vpack.c.b16 %v750, %v748
  %v781 = vpack.c.b16 %v753, %v751
  %v782 = vpack.c.b16 %v754, %v752
  %v783 = vpack.c.b16 %v757, %v755
  %v784 = vpack.c.b16 %v758, %v756
  %v785 = vpack.c.b16 %v761, %v759
  %v786 = vpack.c.b16 %v762, %v760
  %v787 = vpack.c.b16 %v765, %v763
  %v788 = vpack.c.b16 %v766, %v764
  %v789 = vpack.c.b16 %v769, %v767
  %v790 = vpack.c.b16 %v770, %v768
  %v791 = vpack.c.b16 %v773, %v771
  %v792 = vpack.c.b16 %v774, %v772
  %v793 = vpack.c.b16 %v777, %v775
  %v794 = vpack.c.b16 %v778, %v776
  %811 = vmatprep.subr.bf16.mxu0 %v780
  %812 = vmatpush1.bf16.msra.mxu0 %v779
  %813 = vmatprep.subr.bf16.mxu0 %v782
  %814 = vmatpush1.bf16.msra.mxu0 %v781
  %815 = vmatprep.subr.bf16.mxu0 %v784
  %816 = vmatpush1.bf16.msra.mxu0 %v783
  %817 = vmatprep.subr.bf16.mxu0 %v786
  %818 = vmatpush1.bf16.msra.mxu0 %v785
  %819 = vmatprep.subr.bf16.mxu0 %v788
  %820 = vmatpush1.bf16.msra.mxu0 %v787
  %821 = vmatprep.subr.bf16.mxu0 %v790
  %822 = vmatpush1.bf16.msra.mxu0 %v789
  %823 = vmatprep.subr.bf16.mxu0 %v792
  %824 = vmatpush1.bf16.msra.mxu0 %v791
  %825 = vmatprep.subr.bf16.mxu0 %v794
  %826 = vmatpush1.bf16.msra.mxu0 %v793
  %827 = vmatprep.subr.bf16.mxu0 0
  %828 = vmatpush1.bf16.msra.mxu0 0
  %829 = vmatprep.subr.bf16.mxu0 0
  %830 = vmatpush1.bf16.msra.mxu0 0
  %831 = vmatprep.subr.bf16.mxu0 0
  %832 = vmatpush1.bf16.msra.mxu0 0
  %833 = vmatprep.subr.bf16.mxu0 0
  %834 = vmatpush1.bf16.msra.mxu0 0
  %835 = vmatprep.subr.bf16.mxu0 0
  %836 = vmatpush1.bf16.msra.mxu0 0
  %837 = vmatprep.subr.bf16.mxu0 0
  %838 = vmatpush1.bf16.msra.mxu0 0
  %839 = vmatprep.subr.bf16.mxu0 0
  %840 = vmatpush1.bf16.msra.mxu0 0
  %841 = vmatprep.subr.bf16.mxu0 0
  %842 = vmatpush1.bf16.msra.mxu0 0
  %843 = vmatprep.mubr.bf16.mxu0 0
  %844 = vmatmul.mubr.bf16.gmra.mrb[0].mxu0 %v553
  %v845 = vpop.f32.mrb[0].mxu0
  %v846 = vadd.f32 %v713, %v845
  %v847 = vpop.f32.mrb[0].mxu0
  %v848 = vadd.f32 %v715, %v847
  %v849 = vpop.f32.mrb[0].mxu0
  %v850 = vadd.f32 %v717, %v849
  %v851 = vpop.f32.mrb[0].mxu0
  %v852 = vadd.f32 %v719, %v851
  %853 = vmatprep.mubr.bf16.mxu0 0
  %854 = vmatmul.mubr.bf16.gmra.mrb[0].mxu0 %v554
  %v855 = vpop.f32.mrb[0].mxu0
  %v856 = vadd.f32 %v723, %v855
  %v857 = vpop.f32.mrb[0].mxu0
  %v858 = vadd.f32 %v725, %v857
  %v859 = vpop.f32.mrb[0].mxu0
  %v860 = vadd.f32 %v727, %v859
  %v861 = vpop.f32.mrb[0].mxu0
  %v862 = vadd.f32 %v729, %v861
  %863 = vdwg.mxu0
  %s864 = scalar_lea.vmem %s3, 256
  %v865 = vld [vmem:[%s864] sm:$0xff]
  %v866 = vld [vmem:[%s864 + $0x8] sm:$0xff]
  %v867 = vld [vmem:[%s864 + $0x10] sm:$0xff]
  %v868 = vld [vmem:[%s864 + $0x18] sm:$0xff]
  %v869 = vld [vmem:[%s864 + $0x20] sm:$0xff]
  %v870 = vld [vmem:[%s864 + $0x28] sm:$0xff]
  %v871 = vld [vmem:[%s864 + $0x30] sm:$0xff]
  %v872 = vld [vmem:[%s864 + $0x38] sm:$0xff]
  %v873 = vld [vmem:[%s864 + $0x40] sm:$0xff]
  %v874 = vld [vmem:[%s864 + $0x48] sm:$0xff]
  %v875 = vld [vmem:[%s864 + $0x50] sm:$0xff]
  %v876 = vld [vmem:[%s864 + $0x58] sm:$0xff]
  %v877 = vld [vmem:[%s864 + $0x60] sm:$0xff]
  %v878 = vld [vmem:[%s864 + $0x68] sm:$0xff]
  %v879 = vld [vmem:[%s864 + $0x70] sm:$0xff]
  %v880 = vld [vmem:[%s864 + $0x78] sm:$0xff]
  %vm884 = vcmask 1043456
  %v885 = vrot.slane %v553, 4
  %v886 = vrot.slane %v554, 4
  %v887 = vsel %vm884, %v885, %v886
  %v888 = vrot.slane %v555, 4
  %v889 = vsel %vm884, %v886, %v888
  %v908 = vunpack.c.l.b16 %v865
  %v909 = vunpack.c.h.b16 %v865
  %v910 = vunpack.c.l.b16 %v866
  %v911 = vunpack.c.h.b16 %v866
  %v912 = vunpack.c.l.b16 %v867
  %v913 = vunpack.c.h.b16 %v867
  %v914 = vunpack.c.l.b16 %v868
  %v915 = vunpack.c.h.b16 %v868
  %v916 = vunpack.c.l.b16 %v869
  %v917 = vunpack.c.h.b16 %v869
  %v918 = vunpack.c.l.b16 %v870
  %v919 = vunpack.c.h.b16 %v870
  %v920 = vunpack.c.l.b16 %v871
  %v921 = vunpack.c.h.b16 %v871
  %v922 = vunpack.c.l.b16 %v872
  %v923 = vunpack.c.h.b16 %v872
  %v924 = vunpack.c.l.b16 %v873
  %v925 = vunpack.c.h.b16 %v873
  %v926 = vunpack.c.l.b16 %v874
  %v927 = vunpack.c.h.b16 %v874
  %v928 = vunpack.c.l.b16 %v875
  %v929 = vunpack.c.h.b16 %v875
  %v930 = vunpack.c.l.b16 %v876
  %v931 = vunpack.c.h.b16 %v876
  %v932 = vunpack.c.l.b16 %v877
  %v933 = vunpack.c.h.b16 %v877
  %v934 = vunpack.c.l.b16 %v878
  %v935 = vunpack.c.h.b16 %v878
  %v936 = vunpack.c.l.b16 %v879
  %v937 = vunpack.c.h.b16 %v879
  %v938 = vunpack.c.l.b16 %v880
  %v939 = vunpack.c.h.b16 %v880
  %v940 = vpack.c.b16 %v910, %v908
  %v941 = vpack.c.b16 %v911, %v909
  %v942 = vpack.c.b16 %v914, %v912
  %v943 = vpack.c.b16 %v915, %v913
  %v944 = vpack.c.b16 %v918, %v916
  %v945 = vpack.c.b16 %v919, %v917
  %v946 = vpack.c.b16 %v922, %v920
  %v947 = vpack.c.b16 %v923, %v921
  %v948 = vpack.c.b16 %v926, %v924
  %v949 = vpack.c.b16 %v927, %v925
  %v950 = vpack.c.b16 %v930, %v928
  %v951 = vpack.c.b16 %v931, %v929
  %v952 = vpack.c.b16 %v934, %v932
  %v953 = vpack.c.b16 %v935, %v933
  %v954 = vpack.c.b16 %v938, %v936
  %v955 = vpack.c.b16 %v939, %v937
  %972 = vmatprep.subr.bf16.mxu0 %v941
  %973 = vmatpush1.bf16.msra.mxu0 %v940
  %974 = vmatprep.subr.bf16.mxu0 %v943
  %975 = vmatpush1.bf16.msra.mxu0 %v942
  %976 = vmatprep.subr.bf16.mxu0 %v945
  %977 = vmatpush1.bf16.msra.mxu0 %v944
  %978 = vmatprep.subr.bf16.mxu0 %v947
  %979 = vmatpush1.bf16.msra.mxu0 %v946
  %980 = vmatprep.subr.bf16.mxu0 %v949
  %981 = vmatpush1.bf16.msra.mxu0 %v948
  %982 = vmatprep.subr.bf16.mxu0 %v951
  %983 = vmatpush1.bf16.msra.mxu0 %v950
  %984 = vmatprep.subr.bf16.mxu0 %v953
  %985 = vmatpush1.bf16.msra.mxu0 %v952
  %986 = vmatprep.subr.bf16.mxu0 %v955
  %987 = vmatpush1.bf16.msra.mxu0 %v954
  %988 = vmatprep.subr.bf16.mxu0 0
  %989 = vmatpush1.bf16.msra.mxu0 0
  %990 = vmatprep.subr.bf16.mxu0 0
  %991 = vmatpush1.bf16.msra.mxu0 0
  %992 = vmatprep.subr.bf16.mxu0 0
  %993 = vmatpush1.bf16.msra.mxu0 0
  %994 = vmatprep.subr.bf16.mxu0 0
  %995 = vmatpush1.bf16.msra.mxu0 0
  %996 = vmatprep.subr.bf16.mxu0 0
  %997 = vmatpush1.bf16.msra.mxu0 0
  %998 = vmatprep.subr.bf16.mxu0 0
  %999 = vmatpush1.bf16.msra.mxu0 0
  %1000 = vmatprep.subr.bf16.mxu0 0
  %1001 = vmatpush1.bf16.msra.mxu0 0
  %1002 = vmatprep.subr.bf16.mxu0 0
  %1003 = vmatpush1.bf16.msra.mxu0 0
  %1004 = vmatprep.mubr.bf16.mxu0 0
  %1005 = vmatmul.mubr.bf16.gmra.mrb[0].mxu0 %v887
  %v1006 = vpop.f32.mrb[0].mxu0
  %v1007 = vadd.f32 0.0, %v1006
  %v1008 = vpop.f32.mrb[0].mxu0
  %v1009 = vadd.f32 0.0, %v1008
  %v1010 = vpop.f32.mrb[0].mxu0
  %v1011 = vadd.f32 0.0, %v1010
  %v1012 = vpop.f32.mrb[0].mxu0
  %v1013 = vadd.f32 0.0, %v1012
  %1014 = vmatprep.mubr.bf16.mxu0 0
  %1015 = vmatmul.mubr.bf16.gmra.mrb[0].mxu0 %v889
  %v1016 = vpop.f32.mrb[0].mxu0
  %v1017 = vadd.f32 0.0, %v1016
  %v1018 = vpop.f32.mrb[0].mxu0
  %v1019 = vadd.f32 0.0, %v1018
  %v1020 = vpop.f32.mrb[0].mxu0
  %v1021 = vadd.f32 0.0, %v1020
  %v1022 = vpop.f32.mrb[0].mxu0
  %v1023 = vadd.f32 0.0, %v1022
  %1024 = vdwg.mxu0
  %v1025 = vadd.f32 %v846, %v1007
  %v1026 = vadd.f32 %v848, %v1009
  %v1027 = vadd.f32 %v850, %v1011
  %v1028 = vadd.f32 %v852, %v1013
  %v1029 = vadd.f32 %v856, %v1017
  %v1030 = vadd.f32 %v858, %v1019
  %v1031 = vadd.f32 %v860, %v1021
  %v1032 = vadd.f32 %v862, %v1023
  %s1033 = scalar_lea.vmem %s3, 384
  %v1034 = vld [vmem:[%s1033] sm:$0xff]
  %v1035 = vld [vmem:[%s1033 + $0x8] sm:$0xff]
  %v1036 = vld [vmem:[%s1033 + $0x10] sm:$0xff]
  %v1037 = vld [vmem:[%s1033 + $0x18] sm:$0xff]
  %v1038 = vld [vmem:[%s1033 + $0x20] sm:$0xff]
  %v1039 = vld [vmem:[%s1033 + $0x28] sm:$0xff]
  %v1040 = vld [vmem:[%s1033 + $0x30] sm:$0xff]
  %v1041 = vld [vmem:[%s1033 + $0x38] sm:$0xff]
  %v1042 = vld [vmem:[%s1033 + $0x40] sm:$0xff]
  %v1043 = vld [vmem:[%s1033 + $0x48] sm:$0xff]
  %v1044 = vld [vmem:[%s1033 + $0x50] sm:$0xff]
  %v1045 = vld [vmem:[%s1033 + $0x58] sm:$0xff]
  %v1046 = vld [vmem:[%s1033 + $0x60] sm:$0xff]
  %v1047 = vld [vmem:[%s1033 + $0x68] sm:$0xff]
  %v1048 = vld [vmem:[%s1033 + $0x70] sm:$0xff]
  %v1049 = vld [vmem:[%s1033 + $0x78] sm:$0xff]
  %v1053 = vrot.slane %v562, 4
  %v1054 = vrot.slane %v563, 4
  %v1055 = vsel %vm884, %v1053, %v1054
  %v1056 = vrot.slane %v564, 4
  %v1057 = vsel %vm884, %v1054, %v1056
  %v1076 = vunpack.c.l.b16 %v1034
  %v1077 = vunpack.c.h.b16 %v1034
  %v1078 = vunpack.c.l.b16 %v1035
  %v1079 = vunpack.c.h.b16 %v1035
  %v1080 = vunpack.c.l.b16 %v1036
  %v1081 = vunpack.c.h.b16 %v1036
  %v1082 = vunpack.c.l.b16 %v1037
  %v1083 = vunpack.c.h.b16 %v1037
  %v1084 = vunpack.c.l.b16 %v1038
  %v1085 = vunpack.c.h.b16 %v1038
  %v1086 = vunpack.c.l.b16 %v1039
  %v1087 = vunpack.c.h.b16 %v1039
  %v1088 = vunpack.c.l.b16 %v1040
  %v1089 = vunpack.c.h.b16 %v1040
  %v1090 = vunpack.c.l.b16 %v1041
  %v1091 = vunpack.c.h.b16 %v1041
  %v1092 = vunpack.c.l.b16 %v1042
  %v1093 = vunpack.c.h.b16 %v1042
  %v1094 = vunpack.c.l.b16 %v1043
  %v1095 = vunpack.c.h.b16 %v1043
  %v1096 = vunpack.c.l.b16 %v1044
  %v1097 = vunpack.c.h.b16 %v1044
  %v1098 = vunpack.c.l.b16 %v1045
  %v1099 = vunpack.c.h.b16 %v1045
  %v1100 = vunpack.c.l.b16 %v1046
  %v1101 = vunpack.c.h.b16 %v1046
  %v1102 = vunpack.c.l.b16 %v1047
  %v1103 = vunpack.c.h.b16 %v1047
  %v1104 = vunpack.c.l.b16 %v1048
  %v1105 = vunpack.c.h.b16 %v1048
  %v1106 = vunpack.c.l.b16 %v1049
  %v1107 = vunpack.c.h.b16 %v1049
  %v1108 = vpack.c.b16 %v1078, %v1076
  %v1109 = vpack.c.b16 %v1079, %v1077
  %v1110 = vpack.c.b16 %v1082, %v1080
  %v1111 = vpack.c.b16 %v1083, %v1081
  %v1112 = vpack.c.b16 %v1086, %v1084
  %v1113 = vpack.c.b16 %v1087, %v1085
  %v1114 = vpack.c.b16 %v1090, %v1088
  %v1115 = vpack.c.b16 %v1091, %v1089
  %v1116 = vpack.c.b16 %v1094, %v1092
  %v1117 = vpack.c.b16 %v1095, %v1093
  %v1118 = vpack.c.b16 %v1098, %v1096
  %v1119 = vpack.c.b16 %v1099, %v1097
  %v1120 = vpack.c.b16 %v1102, %v1100
  %v1121 = vpack.c.b16 %v1103, %v1101
  %v1122 = vpack.c.b16 %v1106, %v1104
  %v1123 = vpack.c.b16 %v1107, %v1105
  %1140 = vmatprep.subr.bf16.mxu0 %v1109
  %1141 = vmatpush1.bf16.msra.mxu0 %v1108
  %1142 = vmatprep.subr.bf16.mxu0 %v1111
  %1143 = vmatpush1.bf16.msra.mxu0 %v1110
  %1144 = vmatprep.subr.bf16.mxu0 %v1113
  %1145 = vmatpush1.bf16.msra.mxu0 %v1112
  %1146 = vmatprep.subr.bf16.mxu0 %v1115
  %1147 = vmatpush1.bf16.msra.mxu0 %v1114
  %1148 = vmatprep.subr.bf16.mxu0 %v1117
  %1149 = vmatpush1.bf16.msra.mxu0 %v1116
  %1150 = vmatprep.subr.bf16.mxu0 %v1119
  %1151 = vmatpush1.bf16.msra.mxu0 %v1118
  %1152 = vmatprep.subr.bf16.mxu0 %v1121
  %1153 = vmatpush1.bf16.msra.mxu0 %v1120
  %1154 = vmatprep.subr.bf16.mxu0 %v1123
  %1155 = vmatpush1.bf16.msra.mxu0 %v1122
  %1156 = vmatprep.subr.bf16.mxu0 0
  %1157 = vmatpush1.bf16.msra.mxu0 0
  %1158 = vmatprep.subr.bf16.mxu0 0
  %1159 = vmatpush1.bf16.msra.mxu0 0
  %1160 = vmatprep.subr.bf16.mxu0 0
  %1161 = vmatpush1.bf16.msra.mxu0 0
  %1162 = vmatprep.subr.bf16.mxu0 0
  %1163 = vmatpush1.bf16.msra.mxu0 0
  %1164 = vmatprep.subr.bf16.mxu0 0
  %1165 = vmatpush1.bf16.msra.mxu0 0
  %1166 = vmatprep.subr.bf16.mxu0 0
  %1167 = vmatpush1.bf16.msra.mxu0 0
  %1168 = vmatprep.subr.bf16.mxu0 0
  %1169 = vmatpush1.bf16.msra.mxu0 0
  %1170 = vmatprep.subr.bf16.mxu0 0
  %1171 = vmatpush1.bf16.msra.mxu0 0
  %1172 = vmatprep.mubr.bf16.mxu0 0
  %1173 = vmatmul.mubr.bf16.gmra.mrb[0].mxu0 %v1055
  %v1174 = vpop.f32.mrb[0].mxu0
  %v1175 = vadd.f32 0.0, %v1174
  %v1176 = vpop.f32.mrb[0].mxu0
  %v1177 = vadd.f32 0.0, %v1176
  %v1178 = vpop.f32.mrb[0].mxu0
  %v1179 = vadd.f32 0.0, %v1178
  %v1180 = vpop.f32.mrb[0].mxu0
  %v1181 = vadd.f32 0.0, %v1180
  %1182 = vmatprep.mubr.bf16.mxu0 0
  %1183 = vmatmul.mubr.bf16.gmra.mrb[0].mxu0 %v1057
  %v1184 = vpop.f32.mrb[0].mxu0
  %v1185 = vadd.f32 0.0, %v1184
  %v1186 = vpop.f32.mrb[0].mxu0
  %v1187 = vadd.f32 0.0, %v1186
  %v1188 = vpop.f32.mrb[0].mxu0
  %v1189 = vadd.f32 0.0, %v1188
  %v1190 = vpop.f32.mrb[0].mxu0
  %v1191 = vadd.f32 0.0, %v1190
  %1192 = vdwg.mxu0
  %v1193 = vadd.f32 %v1025, %v1175
  %v1194 = vadd.f32 %v1026, %v1177
  %v1195 = vadd.f32 %v1027, %v1179
  %v1196 = vadd.f32 %v1028, %v1181
  %v1197 = vadd.f32 %v1029, %v1185
  %v1198 = vadd.f32 %v1030, %v1187
  %v1199 = vadd.f32 %v1031, %v1189
  %v1200 = vadd.f32 %v1032, %v1191
  %s1201 = scalar_lea.vmem %s3, 512
  %v1202 = vld [vmem:[%s1201] sm:$0xff]
  %v1203 = vld [vmem:[%s1201 + $0x8] sm:$0xff]
  %v1204 = vld [vmem:[%s1201 + $0x10] sm:$0xff]
  %v1205 = vld [vmem:[%s1201 + $0x18] sm:$0xff]
  %v1206 = vld [vmem:[%s1201 + $0x20] sm:$0xff]
  %v1207 = vld [vmem:[%s1201 + $0x28] sm:$0xff]
  %v1208 = vld [vmem:[%s1201 + $0x30] sm:$0xff]
  %v1209 = vld [vmem:[%s1201 + $0x38] sm:$0xff]
  %v1210 = vld [vmem:[%s1201 + $0x40] sm:$0xff]
  %v1211 = vld [vmem:[%s1201 + $0x48] sm:$0xff]
  %v1212 = vld [vmem:[%s1201 + $0x50] sm:$0xff]
  %v1213 = vld [vmem:[%s1201 + $0x58] sm:$0xff]
  %v1214 = vld [vmem:[%s1201 + $0x60] sm:$0xff]
  %v1215 = vld [vmem:[%s1201 + $0x68] sm:$0xff]
  %v1216 = vld [vmem:[%s1201 + $0x70] sm:$0xff]
  %v1217 = vld [vmem:[%s1201 + $0x78] sm:$0xff]
  %v1234 = vunpack.c.l.b16 %v1202
  %v1235 = vunpack.c.h.b16 %v1202
  %v1236 = vunpack.c.l.b16 %v1203
  %v1237 = vunpack.c.h.b16 %v1203
  %v1238 = vunpack.c.l.b16 %v1204
  %v1239 = vunpack.c.h.b16 %v1204
  %v1240 = vunpack.c.l.b16 %v1205
  %v1241 = vunpack.c.h.b16 %v1205
  %v1242 = vunpack.c.l.b16 %v1206
  %v1243 = vunpack.c.h.b16 %v1206
  %v1244 = vunpack.c.l.b16 %v1207
  %v1245 = vunpack.c.h.b16 %v1207
  %v1246 = vunpack.c.l.b16 %v1208
  %v1247 = vunpack.c.h.b16 %v1208
  %v1248 = vunpack.c.l.b16 %v1209
  %v1249 = vunpack.c.h.b16 %v1209
  %v1250 = vunpack.c.l.b16 %v1210
  %v1251 = vunpack.c.h.b16 %v1210
  %v1252 = vunpack.c.l.b16 %v1211
  %v1253 = vunpack.c.h.b16 %v1211
  %v1254 = vunpack.c.l.b16 %v1212
  %v1255 = vunpack.c.h.b16 %v1212
  %v1256 = vunpack.c.l.b16 %v1213
  %v1257 = vunpack.c.h.b16 %v1213
  %v1258 = vunpack.c.l.b16 %v1214
  %v1259 = vunpack.c.h.b16 %v1214
  %v1260 = vunpack.c.l.b16 %v1215
  %v1261 = vunpack.c.h.b16 %v1215
  %v1262 = vunpack.c.l.b16 %v1216
  %v1263 = vunpack.c.h.b16 %v1216
  %v1264 = vunpack.c.l.b16 %v1217
  %v1265 = vunpack.c.h.b16 %v1217
  %v1266 = vpack.c.b16 %v1236, %v1234
  %v1267 = vpack.c.b16 %v1237, %v1235
  %v1268 = vpack.c.b16 %v1240, %v1238
  %v1269 = vpack.c.b16 %v1241, %v1239
  %v1270 = vpack.c.b16 %v1244, %v1242
  %v1271 = vpack.c.b16 %v1245, %v1243
  %v1272 = vpack.c.b16 %v1248, %v1246
  %v1273 = vpack.c.b16 %v1249, %v1247
  %v1274 = vpack.c.b16 %v1252, %v1250
  %v1275 = vpack.c.b16 %v1253, %v1251
  %v1276 = vpack.c.b16 %v1256, %v1254
  %v1277 = vpack.c.b16 %v1257, %v1255
  %v1278 = vpack.c.b16 %v1260, %v1258
  %v1279 = vpack.c.b16 %v1261, %v1259
  %v1280 = vpack.c.b16 %v1264, %v1262
  %v1281 = vpack.c.b16 %v1265, %v1263
  %1298 = vmatprep.subr.bf16.mxu0 %v1267
  %1299 = vmatpush1.bf16.msra.mxu0 %v1266
  %1300 = vmatprep.subr.bf16.mxu0 %v1269
  %1301 = vmatpush1.bf16.msra.mxu0 %v1268
  %1302 = vmatprep.subr.bf16.mxu0 %v1271
  %1303 = vmatpush1.bf16.msra.mxu0 %v1270
  %1304 = vmatprep.subr.bf16.mxu0 %v1273
  %1305 = vmatpush1.bf16.msra.mxu0 %v1272
  %1306 = vmatprep.subr.bf16.mxu0 %v1275
  %1307 = vmatpush1.bf16.msra.mxu0 %v1274
  %1308 = vmatprep.subr.bf16.mxu0 %v1277
  %1309 = vmatpush1.bf16.msra.mxu0 %v1276
  %1310 = vmatprep.subr.bf16.mxu0 %v1279
  %1311 = vmatpush1.bf16.msra.mxu0 %v1278
  %1312 = vmatprep.subr.bf16.mxu0 %v1281
  %1313 = vmatpush1.bf16.msra.mxu0 %v1280
  %1314 = vmatprep.subr.bf16.mxu0 0
  %1315 = vmatpush1.bf16.msra.mxu0 0
  %1316 = vmatprep.subr.bf16.mxu0 0
  %1317 = vmatpush1.bf16.msra.mxu0 0
  %1318 = vmatprep.subr.bf16.mxu0 0
  %1319 = vmatpush1.bf16.msra.mxu0 0
  %1320 = vmatprep.subr.bf16.mxu0 0
  %1321 = vmatpush1.bf16.msra.mxu0 0
  %1322 = vmatprep.subr.bf16.mxu0 0
  %1323 = vmatpush1.bf16.msra.mxu0 0
  %1324 = vmatprep.subr.bf16.mxu0 0
  %1325 = vmatpush1.bf16.msra.mxu0 0
  %1326 = vmatprep.subr.bf16.mxu0 0
  %1327 = vmatpush1.bf16.msra.mxu0 0
  %1328 = vmatprep.subr.bf16.mxu0 0
  %1329 = vmatpush1.bf16.msra.mxu0 0
  %1330 = vmatprep.mubr.bf16.mxu0 0
  %1331 = vmatmul.mubr.bf16.gmra.mrb[0].mxu0 %v554
  %v1332 = vpop.f32.mrb[0].mxu0
  %v1333 = vadd.f32 0.0, %v1332
  %v1334 = vpop.f32.mrb[0].mxu0
  %v1335 = vadd.f32 0.0, %v1334
  %v1336 = vpop.f32.mrb[0].mxu0
  %v1337 = vadd.f32 0.0, %v1336
  %v1338 = vpop.f32.mrb[0].mxu0
  %v1339 = vadd.f32 0.0, %v1338
  %1340 = vmatprep.mubr.bf16.mxu0 0
  %1341 = vmatmul.mubr.bf16.gmra.mrb[0].mxu0 %v555
  %v1342 = vpop.f32.mrb[0].mxu0
  %v1343 = vadd.f32 0.0, %v1342
  %v1344 = vpop.f32.mrb[0].mxu0
  %v1345 = vadd.f32 0.0, %v1344
  %v1346 = vpop.f32.mrb[0].mxu0
  %v1347 = vadd.f32 0.0, %v1346
  %v1348 = vpop.f32.mrb[0].mxu0
  %v1349 = vadd.f32 0.0, %v1348
  %1350 = vdwg.mxu0
  %v1351 = vadd.f32 %v1193, %v1333
  %v1352 = vadd.f32 %v1194, %v1335
  %v1353 = vadd.f32 %v1195, %v1337
  %v1354 = vadd.f32 %v1196, %v1339
  %v1355 = vadd.f32 %v1197, %v1343
  %v1356 = vadd.f32 %v1198, %v1345
  %v1357 = vadd.f32 %v1199, %v1347
  %v1358 = vadd.f32 %v1200, %v1349
  %v1359 = vmax.f32 %v1351, %v1352
  %v1360 = vmax.f32 %v1353, %v1354
  %v1361 = vmax.f32 %v1355, %v1356
  %v1362 = vmax.f32 %v1357, %v1358
  %v1363 = vld [vmem:[%s4] sm:$0x1]
  %v1365 = vlaneseq
  %v1366 = vshrl.u32 %v1365, 7
  %v1367 = vsub.s32 0, %v1366
  %v1368 = vrot.slane %v1363, %v1367
  %v1370 = vadd.f32 %v1359, %v1368
  %v1371 = vadd.f32 %v1360, %v1368
  %v1372 = vadd.f32 %v1361, %v1368
  %v1373 = vadd.f32 %v1362, %v1368
  %v1374 = vmax.f32 %v1370, 0.0
  %v1375 = vmax.f32 %v1371, 0.0
  %v1376 = vmax.f32 %v1372, 0.0
  %v1377 = vmax.f32 %v1373, 0.0
  %1378 = vmatprep.subr.bf16.mxu0 %v647
  %1379 = vmatpush1.bf16.msra.mxu0 %v646
  %1380 = vmatprep.subr.bf16.mxu0 %v649
  %1381 = vmatpush1.bf16.msra.mxu0 %v648
  %1382 = vmatprep.subr.bf16.mxu0 %v651
  %1383 = vmatpush1.bf16.msra.mxu0 %v650
  %1384 = vmatprep.subr.bf16.mxu0 %v653
  %1385 = vmatpush1.bf16.msra.mxu0 %v652
  %1386 = vmatprep.subr.bf16.mxu0 %v655
  %1387 = vmatpush1.bf16.msra.mxu0 %v654
  %1388 = vmatprep.subr.bf16.mxu0 %v657
  %1389 = vmatpush1.bf16.msra.mxu0 %v656
  %1390 = vmatprep.subr.bf16.mxu0 %v659
  %1391 = vmatpush1.bf16.msra.mxu0 %v658
  %1392 = vmatprep.subr.bf16.mxu0 %v661
  %1393 = vmatpush1.bf16.msra.mxu0 %v660
  %1394 = vmatprep.subr.bf16.mxu0 0
  %1395 = vmatpush1.bf16.msra.mxu0 0
  %1396 = vmatprep.subr.bf16.mxu0 0
  %1397 = vmatpush1.bf16.msra.mxu0 0
  %1398 = vmatprep.subr.bf16.mxu0 0
  %1399 = vmatpush1.bf16.msra.mxu0 0
  %1400 = vmatprep.subr.bf16.mxu0 0
  %1401 = vmatpush1.bf16.msra.mxu0 0
  %1402 = vmatprep.subr.bf16.mxu0 0
  %1403 = vmatpush1.bf16.msra.mxu0 0
  %1404 = vmatprep.subr.bf16.mxu0 0
  %1405 = vmatpush1.bf16.msra.mxu0 0
  %1406 = vmatprep.subr.bf16.mxu0 0
  %1407 = vmatpush1.bf16.msra.mxu0 0
  %1408 = vmatprep.subr.bf16.mxu0 0
  %1409 = vmatpush1.bf16.msra.mxu0 0
  %1410 = vmatprep.mubr.bf16.mxu0 0
  %1411 = vmatmul.mubr.bf16.gmra.mrb[0].mxu0 %v887
  %v1412 = vpop.f32.mrb[0].mxu0
  %v1413 = vadd.f32 0.0, %v1412
  %v1414 = vpop.f32.mrb[0].mxu0
  %v1415 = vadd.f32 0.0, %v1414
  %v1416 = vpop.f32.mrb[0].mxu0
  %v1417 = vadd.f32 0.0, %v1416
  %v1418 = vpop.f32.mrb[0].mxu0
  %v1419 = vadd.f32 0.0, %v1418
  %1420 = vmatprep.mubr.bf16.mxu0 0
  %1421 = vmatmul.mubr.bf16.gmra.mrb[0].mxu0 %v889
  %v1422 = vpop.f32.mrb[0].mxu0
  %v1423 = vadd.f32 0.0, %v1422
  %v1424 = vpop.f32.mrb[0].mxu0
  %v1425 = vadd.f32 0.0, %v1424
  %v1426 = vpop.f32.mrb[0].mxu0
  %v1427 = vadd.f32 0.0, %v1426
  %v1428 = vpop.f32.mrb[0].mxu0
  %v1429 = vadd.f32 0.0, %v1428
  %1430 = vdwg.mxu0
  %1431 = vmatprep.subr.bf16.mxu0 %v780
  %1432 = vmatpush1.bf16.msra.mxu0 %v779
  %1433 = vmatprep.subr.bf16.mxu0 %v782
  %1434 = vmatpush1.bf16.msra.mxu0 %v781
  %1435 = vmatprep.subr.bf16.mxu0 %v784
  %1436 = vmatpush1.bf16.msra.mxu0 %v783
  %1437 = vmatprep.subr.bf16.mxu0 %v786
  %1438 = vmatpush1.bf16.msra.mxu0 %v785
  %1439 = vmatprep.subr.bf16.mxu0 %v788
  %1440 = vmatpush1.bf16.msra.mxu0 %v787
  %1441 = vmatprep.subr.bf16.mxu0 %v790
  %1442 = vmatpush1.bf16.msra.mxu0 %v789
  %1443 = vmatprep.subr.bf16.mxu0 %v792
  %1444 = vmatpush1.bf16.msra.mxu0 %v791
  %1445 = vmatprep.subr.bf16.mxu0 %v794
  %1446 = vmatpush1.bf16.msra.mxu0 %v793
  %1447 = vmatprep.subr.bf16.mxu0 0
  %1448 = vmatpush1.bf16.msra.mxu0 0
  %1449 = vmatprep.subr.bf16.mxu0 0
  %1450 = vmatpush1.bf16.msra.mxu0 0
  %1451 = vmatprep.subr.bf16.mxu0 0
  %1452 = vmatpush1.bf16.msra.mxu0 0
  %1453 = vmatprep.subr.bf16.mxu0 0
  %1454 = vmatpush1.bf16.msra.mxu0 0
  %1455 = vmatprep.subr.bf16.mxu0 0
  %1456 = vmatpush1.bf16.msra.mxu0 0
  %1457 = vmatprep.subr.bf16.mxu0 0
  %1458 = vmatpush1.bf16.msra.mxu0 0
  %1459 = vmatprep.subr.bf16.mxu0 0
  %1460 = vmatpush1.bf16.msra.mxu0 0
  %1461 = vmatprep.subr.bf16.mxu0 0
  %1462 = vmatpush1.bf16.msra.mxu0 0
  %1463 = vmatprep.mubr.bf16.mxu0 0
  %1464 = vmatmul.mubr.bf16.gmra.mrb[0].mxu0 %v562
  %v1465 = vpop.f32.mrb[0].mxu0
  %v1466 = vadd.f32 %v1413, %v1465
  %v1467 = vpop.f32.mrb[0].mxu0
  %v1468 = vadd.f32 %v1415, %v1467
  %v1469 = vpop.f32.mrb[0].mxu0
  %v1470 = vadd.f32 %v1417, %v1469
  %v1471 = vpop.f32.mrb[0].mxu0
  %v1472 = vadd.f32 %v1419, %v1471
  %1473 = vmatprep.mubr.bf16.mxu0 0
  %1474 = vmatmul.mubr.bf16.gmra.mrb[0].mxu0 %v563
  %v1475 = vpop.f32.mrb[0].mxu0
  %v1476 = vadd.f32 %v1423, %v1475
  %v1477 = vpop.f32.mrb[0].mxu0
  %v1478 = vadd.f32 %v1425, %v1477
  %v1479 = vpop.f32.mrb[0].mxu0
  %v1480 = vadd.f32 %v1427, %v1479
  %v1481 = vpop.f32.mrb[0].mxu0
  %v1482 = vadd.f32 %v1429, %v1481
  %1483 = vdwg.mxu0
  %1484 = vmatprep.subr.bf16.mxu0 %v941
  %1485 = vmatpush1.bf16.msra.mxu0 %v940
  %1486 = vmatprep.subr.bf16.mxu0 %v943
  %1487 = vmatpush1.bf16.msra.mxu0 %v942
  %1488 = vmatprep.subr.bf16.mxu0 %v945
  %1489 = vmatpush1.bf16.msra.mxu0 %v944
  %1490 = vmatprep.subr.bf16.mxu0 %v947
  %1491 = vmatpush1.bf16.msra.mxu0 %v946
  %1492 = vmatprep.subr.bf16.mxu0 %v949
  %1493 = vmatpush1.bf16.msra.mxu0 %v948
  %1494 = vmatprep.subr.bf16.mxu0 %v951
  %1495 = vmatpush1.bf16.msra.mxu0 %v950
  %1496 = vmatprep.subr.bf16.mxu0 %v953
  %1497 = vmatpush1.bf16.msra.mxu0 %v952
  %1498 = vmatprep.subr.bf16.mxu0 %v955
  %1499 = vmatpush1.bf16.msra.mxu0 %v954
  %1500 = vmatprep.subr.bf16.mxu0 0
  %1501 = vmatpush1.bf16.msra.mxu0 0
  %1502 = vmatprep.subr.bf16.mxu0 0
  %1503 = vmatpush1.bf16.msra.mxu0 0
  %1504 = vmatprep.subr.bf16.mxu0 0
  %1505 = vmatpush1.bf16.msra.mxu0 0
  %1506 = vmatprep.subr.bf16.mxu0 0
  %1507 = vmatpush1.bf16.msra.mxu0 0
  %1508 = vmatprep.subr.bf16.mxu0 0
  %1509 = vmatpush1.bf16.msra.mxu0 0
  %1510 = vmatprep.subr.bf16.mxu0 0
  %1511 = vmatpush1.bf16.msra.mxu0 0
  %1512 = vmatprep.subr.bf16.mxu0 0
  %1513 = vmatpush1.bf16.msra.mxu0 0
  %1514 = vmatprep.subr.bf16.mxu0 0
  %1515 = vmatpush1.bf16.msra.mxu0 0
  %1516 = vmatprep.mubr.bf16.mxu0 0
  %1517 = vmatmul.mubr.bf16.gmra.mrb[0].mxu0 %v1055
  %v1518 = vpop.f32.mrb[0].mxu0
  %v1519 = vadd.f32 0.0, %v1518
  %v1520 = vpop.f32.mrb[0].mxu0
  %v1521 = vadd.f32 0.0, %v1520
  %v1522 = vpop.f32.mrb[0].mxu0
  %v1523 = vadd.f32 0.0, %v1522
  %v1524 = vpop.f32.mrb[0].mxu0
  %v1525 = vadd.f32 0.0, %v1524
  %1526 = vmatprep.mubr.bf16.mxu0 0
  %1527 = vmatmul.mubr.bf16.gmra.mrb[0].mxu0 %v1057
  %v1528 = vpop.f32.mrb[0].mxu0
  %v1529 = vadd.f32 0.0, %v1528
  %v1530 = vpop.f32.mrb[0].mxu0
  %v1531 = vadd.f32 0.0, %v1530
  %v1532 = vpop.f32.mrb[0].mxu0
  %v1533 = vadd.f32 0.0, %v1532
  %v1534 = vpop.f32.mrb[0].mxu0
  %v1535 = vadd.f32 0.0, %v1534
  %1536 = vdwg.mxu0
  %v1537 = vadd.f32 %v1466, %v1519
  %v1538 = vadd.f32 %v1468, %v1521
  %v1539 = vadd.f32 %v1470, %v1523
  %v1540 = vadd.f32 %v1472, %v1525
  %v1541 = vadd.f32 %v1476, %v1529
  %v1542 = vadd.f32 %v1478, %v1531
  %v1543 = vadd.f32 %v1480, %v1533
  %v1544 = vadd.f32 %v1482, %v1535
  %1545 = vmatprep.subr.bf16.mxu0 %v1109
  %1546 = vmatpush1.bf16.msra.mxu0 %v1108
  %1547 = vmatprep.subr.bf16.mxu0 %v1111
  %1548 = vmatpush1.bf16.msra.mxu0 %v1110
  %1549 = vmatprep.subr.bf16.mxu0 %v1113
  %1550 = vmatpush1.bf16.msra.mxu0 %v1112
  %1551 = vmatprep.subr.bf16.mxu0 %v1115
  %1552 = vmatpush1.bf16.msra.mxu0 %v1114
  %1553 = vmatprep.subr.bf16.mxu0 %v1117
  %1554 = vmatpush1.bf16.msra.mxu0 %v1116
  %1555 = vmatprep.subr.bf16.mxu0 %v1119
  %1556 = vmatpush1.bf16.msra.mxu0 %v1118
  %1557 = vmatprep.subr.bf16.mxu0 %v1121
  %1558 = vmatpush1.bf16.msra.mxu0 %v1120
  %1559 = vmatprep.subr.bf16.mxu0 %v1123
  %1560 = vmatpush1.bf16.msra.mxu0 %v1122
  %1561 = vmatprep.subr.bf16.mxu0 0
  %1562 = vmatpush1.bf16.msra.mxu0 0
  %1563 = vmatprep.subr.bf16.mxu0 0
  %1564 = vmatpush1.bf16.msra.mxu0 0
  %1565 = vmatprep.subr.bf16.mxu0 0
  %1566 = vmatpush1.bf16.msra.mxu0 0
  %1567 = vmatprep.subr.bf16.mxu0 0
  %1568 = vmatpush1.bf16.msra.mxu0 0
  %1569 = vmatprep.subr.bf16.mxu0 0
  %1570 = vmatpush1.bf16.msra.mxu0 0
  %1571 = vmatprep.subr.bf16.mxu0 0
  %1572 = vmatpush1.bf16.msra.mxu0 0
  %1573 = vmatprep.subr.bf16.mxu0 0
  %1574 = vmatpush1.bf16.msra.mxu0 0
  %1575 = vmatprep.subr.bf16.mxu0 0
  %1576 = vmatpush1.bf16.msra.mxu0 0
  %1577 = vmatprep.mubr.bf16.mxu0 0
  %1578 = vmatmul.mubr.bf16.gmra.mrb[0].mxu0 %v554
  %v1579 = vpop.f32.mrb[0].mxu0
  %v1580 = vadd.f32 0.0, %v1579
  %v1581 = vpop.f32.mrb[0].mxu0
  %v1582 = vadd.f32 0.0, %v1581
  %v1583 = vpop.f32.mrb[0].mxu0
  %v1584 = vadd.f32 0.0, %v1583
  %v1585 = vpop.f32.mrb[0].mxu0
  %v1586 = vadd.f32 0.0, %v1585
  %1587 = vmatprep.mubr.bf16.mxu0 0
  %1588 = vmatmul.mubr.bf16.gmra.mrb[0].mxu0 %v555
  %v1589 = vpop.f32.mrb[0].mxu0
  %v1590 = vadd.f32 0.0, %v1589
  %v1591 = vpop.f32.mrb[0].mxu0
  %v1592 = vadd.f32 0.0, %v1591
  %v1593 = vpop.f32.mrb[0].mxu0
  %v1594 = vadd.f32 0.0, %v1593
  %v1595 = vpop.f32.mrb[0].mxu0
  %v1596 = vadd.f32 0.0, %v1595
  %1597 = vdwg.mxu0
  %v1598 = vadd.f32 %v1537, %v1580
  %v1599 = vadd.f32 %v1538, %v1582
  %v1600 = vadd.f32 %v1539, %v1584
  %v1601 = vadd.f32 %v1540, %v1586
  %v1602 = vadd.f32 %v1541, %v1590
  %v1603 = vadd.f32 %v1542, %v1592
  %v1604 = vadd.f32 %v1543, %v1594
  %v1605 = vadd.f32 %v1544, %v1596
  %1606 = vmatprep.subr.bf16.mxu0 %v1267
  %1607 = vmatpush1.bf16.msra.mxu0 %v1266
  %1608 = vmatprep.subr.bf16.mxu0 %v1269
  %1609 = vmatpush1.bf16.msra.mxu0 %v1268
  %1610 = vmatprep.subr.bf16.mxu0 %v1271
  %1611 = vmatpush1.bf16.msra.mxu0 %v1270
  %1612 = vmatprep.subr.bf16.mxu0 %v1273
  %1613 = vmatpush1.bf16.msra.mxu0 %v1272
  %1614 = vmatprep.subr.bf16.mxu0 %v1275
  %1615 = vmatpush1.bf16.msra.mxu0 %v1274
  %1616 = vmatprep.subr.bf16.mxu0 %v1277
  %1617 = vmatpush1.bf16.msra.mxu0 %v1276
  %1618 = vmatprep.subr.bf16.mxu0 %v1279
  %1619 = vmatpush1.bf16.msra.mxu0 %v1278
  %1620 = vmatprep.subr.bf16.mxu0 %v1281
  %1621 = vmatpush1.bf16.msra.mxu0 %v1280
  %1622 = vmatprep.subr.bf16.mxu0 0
  %1623 = vmatpush1.bf16.msra.mxu0 0
  %1624 = vmatprep.subr.bf16.mxu0 0
  %1625 = vmatpush1.bf16.msra.mxu0 0
  %1626 = vmatprep.subr.bf16.mxu0 0
  %1627 = vmatpush1.bf16.msra.mxu0 0
  %1628 = vmatprep.subr.bf16.mxu0 0
  %1629 = vmatpush1.bf16.msra.mxu0 0
  %1630 = vmatprep.subr.bf16.mxu0 0
  %1631 = vmatpush1.bf16.msra.mxu0 0
  %1632 = vmatprep.subr.bf16.mxu0 0
  %1633 = vmatpush1.bf16.msra.mxu0 0
  %1634 = vmatprep.subr.bf16.mxu0 0
  %1635 = vmatpush1.bf16.msra.mxu0 0
  %1636 = vmatprep.subr.bf16.mxu0 0
  %1637 = vmatpush1.bf16.msra.mxu0 0
  %1638 = vmatprep.mubr.bf16.mxu0 0
  %1639 = vmatmul.mubr.bf16.gmra.mrb[0].mxu0 %v563
  %v1640 = vpop.f32.mrb[0].mxu0
  %v1641 = vadd.f32 0.0, %v1640
  %v1642 = vpop.f32.mrb[0].mxu0
  %v1643 = vadd.f32 0.0, %v1642
  %v1644 = vpop.f32.mrb[0].mxu0
  %v1645 = vadd.f32 0.0, %v1644
  %v1646 = vpop.f32.mrb[0].mxu0
  %v1647 = vadd.f32 0.0, %v1646
  %1648 = vmatprep.mubr.bf16.mxu0 0
  %1649 = vmatmul.mubr.bf16.gmra.mrb[0].mxu0 %v564
  %v1650 = vpop.f32.mrb[0].mxu0
  %v1651 = vadd.f32 0.0, %v1650
  %v1652 = vpop.f32.mrb[0].mxu0
  %v1653 = vadd.f32 0.0, %v1652
  %v1654 = vpop.f32.mrb[0].mxu0
  %v1655 = vadd.f32 0.0, %v1654
  %v1656 = vpop.f32.mrb[0].mxu0
  %v1657 = vadd.f32 0.0, %v1656
  %1658 = vdwg.mxu0
  %v1659 = vadd.f32 %v1598, %v1641
  %v1660 = vadd.f32 %v1599, %v1643
  %v1661 = vadd.f32 %v1600, %v1645
  %v1662 = vadd.f32 %v1601, %v1647
  %v1663 = vadd.f32 %v1602, %v1651
  %v1664 = vadd.f32 %v1603, %v1653
  %v1665 = vadd.f32 %v1604, %v1655
  %v1666 = vadd.f32 %v1605, %v1657
  %v1667 = vmax.f32 %v1659, %v1660
  %v1668 = vmax.f32 %v1661, %v1662
  %v1669 = vmax.f32 %v1663, %v1664
  %v1670 = vmax.f32 %v1665, %v1666
  %v1671 = vadd.f32 %v1667, %v1368
  %v1672 = vadd.f32 %v1668, %v1368
  %v1673 = vadd.f32 %v1669, %v1368
  %v1674 = vadd.f32 %v1670, %v1368
  %v1675 = vmax.f32 %v1671, 0.0
  %v1676 = vmax.f32 %v1672, 0.0
  %v1677 = vmax.f32 %v1673, 0.0
  %v1678 = vmax.f32 %v1674, 0.0
  %v1679 = vmax.f32 %v1374, %v1675
  %v1680 = vmax.f32 %v1375, %v1676
  %v1681 = vmax.f32 %v1376, %v1677
  %v1682 = vmax.f32 %v1377, %v1678
  %v1683 = vpack.c.bf16 %v1680, %v1679
  %v1684 = vpack.c.bf16 %v1682, %v1681
  %v1685 = vld [vmem:[%s5] sm:$0xf]
  %v1686 = vld [vmem:[%s5 + $0x4] sm:$0xf]
  %v1687 = vld [vmem:[%s5 + $0x8] sm:$0xf]
  %v1688 = vld [vmem:[%s5 + $0xc] sm:$0xf]
  %v1689 = vld [vmem:[%s5 + $0x10] sm:$0xf]
  %v1690 = vld [vmem:[%s5 + $0x14] sm:$0xf]
  %v1691 = vld [vmem:[%s5 + $0x18] sm:$0xf]
  %v1692 = vld [vmem:[%s5 + $0x1c] sm:$0xf]
  %v1693 = vld [vmem:[%s5 + $0x20] sm:$0xf]
  %v1694 = vld [vmem:[%s5 + $0x24] sm:$0xf]
  %v1695 = vld [vmem:[%s5 + $0x28] sm:$0xf]
  %v1696 = vld [vmem:[%s5 + $0x2c] sm:$0xf]
  %v1697 = vld [vmem:[%s5 + $0x30] sm:$0xf]
  %v1698 = vld [vmem:[%s5 + $0x34] sm:$0xf]
  %v1699 = vld [vmem:[%s5 + $0x38] sm:$0xf]
  %v1700 = vld [vmem:[%s5 + $0x3c] sm:$0xf]
  %s1701 = scalar_lea.vmem %s5, 64
  %v1702 = vld [vmem:[%s1701] sm:$0xf]
  %v1703 = vld [vmem:[%s1701 + $0x4] sm:$0xf]
  %v1704 = vld [vmem:[%s1701 + $0x8] sm:$0xf]
  %v1705 = vld [vmem:[%s1701 + $0xc] sm:$0xf]
  %v1706 = vld [vmem:[%s1701 + $0x10] sm:$0xf]
  %v1707 = vld [vmem:[%s1701 + $0x14] sm:$0xf]
  %v1708 = vld [vmem:[%s1701 + $0x18] sm:$0xf]
  %v1709 = vld [vmem:[%s1701 + $0x1c] sm:$0xf]
  %v1710 = vld [vmem:[%s1701 + $0x20] sm:$0xf]
  %v1711 = vld [vmem:[%s1701 + $0x24] sm:$0xf]
  %v1712 = vld [vmem:[%s1701 + $0x28] sm:$0xf]
  %v1713 = vld [vmem:[%s1701 + $0x2c] sm:$0xf]
  %v1714 = vld [vmem:[%s1701 + $0x30] sm:$0xf]
  %v1715 = vld [vmem:[%s1701 + $0x34] sm:$0xf]
  %v1716 = vld [vmem:[%s1701 + $0x38] sm:$0xf]
  %v1717 = vld [vmem:[%s1701 + $0x3c] sm:$0xf]
  %v1719 = vrot.slane %v1683, 4
  %v1737 = vunpack.c.l.b16 %v1702
  %v1738 = vunpack.c.l.b16 %v1703
  %v1739 = vunpack.c.l.b16 %v1704
  %v1740 = vunpack.c.l.b16 %v1705
  %v1741 = vunpack.c.l.b16 %v1706
  %v1742 = vunpack.c.l.b16 %v1707
  %v1743 = vunpack.c.l.b16 %v1708
  %v1744 = vunpack.c.l.b16 %v1709
  %v1745 = vunpack.c.l.b16 %v1710
  %v1746 = vunpack.c.l.b16 %v1711
  %v1747 = vunpack.c.l.b16 %v1712
  %v1748 = vunpack.c.l.b16 %v1713
  %v1749 = vunpack.c.l.b16 %v1714
  %v1750 = vunpack.c.l.b16 %v1715
  %v1751 = vunpack.c.l.b16 %v1716
  %v1752 = vunpack.c.l.b16 %v1717
  %v1753 = vpack.c.b16 %v1738, %v1737
  %v1754 = vpack.c.b16 %v1740, %v1739
  %v1755 = vpack.c.b16 %v1742, %v1741
  %v1756 = vpack.c.b16 %v1744, %v1743
  %v1757 = vpack.c.b16 %v1746, %v1745
  %v1758 = vpack.c.b16 %v1748, %v1747
  %v1759 = vpack.c.b16 %v1750, %v1749
  %v1760 = vpack.c.b16 %v1752, %v1751
  %1769 = vmatprep.subr.bf16.mxu0 0
  %1770 = vmatpush1.bf16.msra.mxu0 %v1753
  %1771 = vmatprep.subr.bf16.mxu0 0
  %1772 = vmatpush1.bf16.msra.mxu0 %v1754
  %1773 = vmatprep.subr.bf16.mxu0 0
  %1774 = vmatpush1.bf16.msra.mxu0 %v1755
  %1775 = vmatprep.subr.bf16.mxu0 0
  %1776 = vmatpush1.bf16.msra.mxu0 %v1756
  %1777 = vmatprep.subr.bf16.mxu0 0
  %1778 = vmatpush1.bf16.msra.mxu0 %v1757
  %1779 = vmatprep.subr.bf16.mxu0 0
  %1780 = vmatpush1.bf16.msra.mxu0 %v1758
  %1781 = vmatprep.subr.bf16.mxu0 0
  %1782 = vmatpush1.bf16.msra.mxu0 %v1759
  %1783 = vmatprep.subr.bf16.mxu0 0
  %1784 = vmatpush1.bf16.msra.mxu0 %v1760
  %1785 = vmatprep.subr.bf16.mxu0 0
  %1786 = vmatpush1.bf16.msra.mxu0 0
  %1787 = vmatprep.subr.bf16.mxu0 0
  %1788 = vmatpush1.bf16.msra.mxu0 0
  %1789 = vmatprep.subr.bf16.mxu0 0
  %1790 = vmatpush1.bf16.msra.mxu0 0
  %1791 = vmatprep.subr.bf16.mxu0 0
  %1792 = vmatpush1.bf16.msra.mxu0 0
  %1793 = vmatprep.subr.bf16.mxu0 0
  %1794 = vmatpush1.bf16.msra.mxu0 0
  %1795 = vmatprep.subr.bf16.mxu0 0
  %1796 = vmatpush1.bf16.msra.mxu0 0
  %1797 = vmatprep.subr.bf16.mxu0 0
  %1798 = vmatpush1.bf16.msra.mxu0 0
  %1799 = vmatprep.subr.bf16.mxu0 0
  %1800 = vmatpush1.bf16.msra.mxu0 0
  %1801 = vmatprep.mubr.bf16.mxu0 0
  %1802 = vmatmul.mubr.bf16.gmra.mrb[0].mxu0 %v1719
  %v1803 = vpop.f32.mrb[0].mxu0
  %v1804 = vadd.f32 0.0, %v1803
  %v1805 = vpop.f32.mrb[0].mxu0
  %v1806 = vpop.f32.mrb[0].mxu0
  %v1807 = vpop.f32.mrb[0].mxu0
  %1808 = vdwg.mxu0
  %v1825 = vunpack.c.l.b16 %v1685
  %v1826 = vunpack.c.l.b16 %v1686
  %v1827 = vunpack.c.l.b16 %v1687
  %v1828 = vunpack.c.l.b16 %v1688
  %v1829 = vunpack.c.l.b16 %v1689
  %v1830 = vunpack.c.l.b16 %v1690
  %v1831 = vunpack.c.l.b16 %v1691
  %v1832 = vunpack.c.l.b16 %v1692
  %v1833 = vunpack.c.l.b16 %v1693
  %v1834 = vunpack.c.l.b16 %v1694
  %v1835 = vunpack.c.l.b16 %v1695
  %v1836 = vunpack.c.l.b16 %v1696
  %v1837 = vunpack.c.l.b16 %v1697
  %v1838 = vunpack.c.l.b16 %v1698
  %v1839 = vunpack.c.l.b16 %v1699
  %v1840 = vunpack.c.l.b16 %v1700
  %v1841 = vpack.c.b16 %v1826, %v1825
  %v1842 = vpack.c.b16 %v1828, %v1827
  %v1843 = vpack.c.b16 %v1830, %v1829
  %v1844 = vpack.c.b16 %v1832, %v1831
  %v1845 = vpack.c.b16 %v1834, %v1833
  %v1846 = vpack.c.b16 %v1836, %v1835
  %v1847 = vpack.c.b16 %v1838, %v1837
  %v1848 = vpack.c.b16 %v1840, %v1839
  %1857 = vmatprep.subr.bf16.mxu0 0
  %1858 = vmatpush1.bf16.msra.mxu0 %v1841
  %1859 = vmatprep.subr.bf16.mxu0 0
  %1860 = vmatpush1.bf16.msra.mxu0 %v1842
  %1861 = vmatprep.subr.bf16.mxu0 0
  %1862 = vmatpush1.bf16.msra.mxu0 %v1843
  %1863 = vmatprep.subr.bf16.mxu0 0
  %1864 = vmatpush1.bf16.msra.mxu0 %v1844
  %1865 = vmatprep.subr.bf16.mxu0 0
  %1866 = vmatpush1.bf16.msra.mxu0 %v1845
  %1867 = vmatprep.subr.bf16.mxu0 0
  %1868 = vmatpush1.bf16.msra.mxu0 %v1846
  %1869 = vmatprep.subr.bf16.mxu0 0
  %1870 = vmatpush1.bf16.msra.mxu0 %v1847
  %1871 = vmatprep.subr.bf16.mxu0 0
  %1872 = vmatpush1.bf16.msra.mxu0 %v1848
  %1873 = vmatprep.subr.bf16.mxu0 0
  %1874 = vmatpush1.bf16.msra.mxu0 0
  %1875 = vmatprep.subr.bf16.mxu0 0
  %1876 = vmatpush1.bf16.msra.mxu0 0
  %1877 = vmatprep.subr.bf16.mxu0 0
  %1878 = vmatpush1.bf16.msra.mxu0 0
  %1879 = vmatprep.subr.bf16.mxu0 0
  %1880 = vmatpush1.bf16.msra.mxu0 0
  %1881 = vmatprep.subr.bf16.mxu0 0
  %1882 = vmatpush1.bf16.msra.mxu0 0
  %1883 = vmatprep.subr.bf16.mxu0 0
  %1884 = vmatpush1.bf16.msra.mxu0 0
  %1885 = vmatprep.subr.bf16.mxu0 0
  %1886 = vmatpush1.bf16.msra.mxu0 0
  %1887 = vmatprep.subr.bf16.mxu0 0
  %1888 = vmatpush1.bf16.msra.mxu0 0
  %1889 = vmatprep.mubr.bf16.mxu0 0
  %1890 = vmatmul.mubr.bf16.gmra.mrb[0].mxu0 %v1683
  %v1891 = vpop.f32.mrb[0].mxu0
  %v1892 = vadd.f32 %v1804, %v1891
  %v1893 = vpop.f32.mrb[0].mxu0
  %v1894 = vpop.f32.mrb[0].mxu0
  %v1895 = vpop.f32.mrb[0].mxu0
  %1896 = vdwg.mxu0
  %s1897 = scalar_lea.vmem %s5, 128
  %v1898 = vld [vmem:[%s1897] sm:$0xf]
  %v1899 = vld [vmem:[%s1897 + $0x4] sm:$0xf]
  %v1900 = vld [vmem:[%s1897 + $0x8] sm:$0xf]
  %v1901 = vld [vmem:[%s1897 + $0xc] sm:$0xf]
  %v1902 = vld [vmem:[%s1897 + $0x10] sm:$0xf]
  %v1903 = vld [vmem:[%s1897 + $0x14] sm:$0xf]
  %v1904 = vld [vmem:[%s1897 + $0x18] sm:$0xf]
  %v1905 = vld [vmem:[%s1897 + $0x1c] sm:$0xf]
  %v1906 = vld [vmem:[%s1897 + $0x20] sm:$0xf]
  %v1907 = vld [vmem:[%s1897 + $0x24] sm:$0xf]
  %v1908 = vld [vmem:[%s1897 + $0x28] sm:$0xf]
  %v1909 = vld [vmem:[%s1897 + $0x2c] sm:$0xf]
  %v1910 = vld [vmem:[%s1897 + $0x30] sm:$0xf]
  %v1911 = vld [vmem:[%s1897 + $0x34] sm:$0xf]
  %v1912 = vld [vmem:[%s1897 + $0x38] sm:$0xf]
  %v1913 = vld [vmem:[%s1897 + $0x3c] sm:$0xf]
  %v1930 = vunpack.c.l.b16 %v1898
  %v1931 = vunpack.c.l.b16 %v1899
  %v1932 = vunpack.c.l.b16 %v1900
  %v1933 = vunpack.c.l.b16 %v1901
  %v1934 = vunpack.c.l.b16 %v1902
  %v1935 = vunpack.c.l.b16 %v1903
  %v1936 = vunpack.c.l.b16 %v1904
  %v1937 = vunpack.c.l.b16 %v1905
  %v1938 = vunpack.c.l.b16 %v1906
  %v1939 = vunpack.c.l.b16 %v1907
  %v1940 = vunpack.c.l.b16 %v1908
  %v1941 = vunpack.c.l.b16 %v1909
  %v1942 = vunpack.c.l.b16 %v1910
  %v1943 = vunpack.c.l.b16 %v1911
  %v1944 = vunpack.c.l.b16 %v1912
  %v1945 = vunpack.c.l.b16 %v1913
  %v1946 = vpack.c.b16 %v1931, %v1930
  %v1947 = vpack.c.b16 %v1933, %v1932
  %v1948 = vpack.c.b16 %v1935, %v1934
  %v1949 = vpack.c.b16 %v1937, %v1936
  %v1950 = vpack.c.b16 %v1939, %v1938
  %v1951 = vpack.c.b16 %v1941, %v1940
  %v1952 = vpack.c.b16 %v1943, %v1942
  %v1953 = vpack.c.b16 %v1945, %v1944
  %1962 = vmatprep.subr.bf16.mxu0 0
  %1963 = vmatpush1.bf16.msra.mxu0 %v1946
  %1964 = vmatprep.subr.bf16.mxu0 0
  %1965 = vmatpush1.bf16.msra.mxu0 %v1947
  %1966 = vmatprep.subr.bf16.mxu0 0
  %1967 = vmatpush1.bf16.msra.mxu0 %v1948
  %1968 = vmatprep.subr.bf16.mxu0 0
  %1969 = vmatpush1.bf16.msra.mxu0 %v1949
  %1970 = vmatprep.subr.bf16.mxu0 0
  %1971 = vmatpush1.bf16.msra.mxu0 %v1950
  %1972 = vmatprep.subr.bf16.mxu0 0
  %1973 = vmatpush1.bf16.msra.mxu0 %v1951
  %1974 = vmatprep.subr.bf16.mxu0 0
  %1975 = vmatpush1.bf16.msra.mxu0 %v1952
  %1976 = vmatprep.subr.bf16.mxu0 0
  %1977 = vmatpush1.bf16.msra.mxu0 %v1953
  %1978 = vmatprep.subr.bf16.mxu0 0
  %1979 = vmatpush1.bf16.msra.mxu0 0
  %1980 = vmatprep.subr.bf16.mxu0 0
  %1981 = vmatpush1.bf16.msra.mxu0 0
  %1982 = vmatprep.subr.bf16.mxu0 0
  %1983 = vmatpush1.bf16.msra.mxu0 0
  %1984 = vmatprep.subr.bf16.mxu0 0
  %1985 = vmatpush1.bf16.msra.mxu0 0
  %1986 = vmatprep.subr.bf16.mxu0 0
  %1987 = vmatpush1.bf16.msra.mxu0 0
  %1988 = vmatprep.subr.bf16.mxu0 0
  %1989 = vmatpush1.bf16.msra.mxu0 0
  %1990 = vmatprep.subr.bf16.mxu0 0
  %1991 = vmatpush1.bf16.msra.mxu0 0
  %1992 = vmatprep.subr.bf16.mxu0 0
  %1993 = vmatpush1.bf16.msra.mxu0 0
  %1994 = vmatprep.mubr.bf16.mxu0 0
  %1995 = vmatmul.mubr.bf16.gmra.mrb[0].mxu0 %v1684
  %v1996 = vpop.f32.mrb[0].mxu0
  %v1997 = vadd.f32 0.0, %v1996
  %v1998 = vpop.f32.mrb[0].mxu0
  %v1999 = vpop.f32.mrb[0].mxu0
  %v2000 = vpop.f32.mrb[0].mxu0
  %2001 = vdwg.mxu0
  %v2002 = vadd.f32 %v1892, %v1997
  %s2003 = scalar_lea.vmem %s5, 192
  %v2004 = vld [vmem:[%s2003] sm:$0xf]
  %v2005 = vld [vmem:[%s2003 + $0x4] sm:$0xf]
  %v2006 = vld [vmem:[%s2003 + $0x8] sm:$0xf]
  %v2007 = vld [vmem:[%s2003 + $0xc] sm:$0xf]
  %v2008 = vld [vmem:[%s2003 + $0x10] sm:$0xf]
  %v2009 = vld [vmem:[%s2003 + $0x14] sm:$0xf]
  %v2010 = vld [vmem:[%s2003 + $0x18] sm:$0xf]
  %v2011 = vld [vmem:[%s2003 + $0x1c] sm:$0xf]
  %v2012 = vld [vmem:[%s2003 + $0x20] sm:$0xf]
  %v2013 = vld [vmem:[%s2003 + $0x24] sm:$0xf]
  %v2014 = vld [vmem:[%s2003 + $0x28] sm:$0xf]
  %v2015 = vld [vmem:[%s2003 + $0x2c] sm:$0xf]
  %v2016 = vld [vmem:[%s2003 + $0x30] sm:$0xf]
  %v2017 = vld [vmem:[%s2003 + $0x34] sm:$0xf]
  %v2018 = vld [vmem:[%s2003 + $0x38] sm:$0xf]
  %v2019 = vld [vmem:[%s2003 + $0x3c] sm:$0xf]
  %v2021 = vrot.slane %v1684, 4
  %v2039 = vunpack.c.l.b16 %v2004
  %v2040 = vunpack.c.l.b16 %v2005
  %v2041 = vunpack.c.l.b16 %v2006
  %v2042 = vunpack.c.l.b16 %v2007
  %v2043 = vunpack.c.l.b16 %v2008
  %v2044 = vunpack.c.l.b16 %v2009
  %v2045 = vunpack.c.l.b16 %v2010
  %v2046 = vunpack.c.l.b16 %v2011
  %v2047 = vunpack.c.l.b16 %v2012
  %v2048 = vunpack.c.l.b16 %v2013
  %v2049 = vunpack.c.l.b16 %v2014
  %v2050 = vunpack.c.l.b16 %v2015
  %v2051 = vunpack.c.l.b16 %v2016
  %v2052 = vunpack.c.l.b16 %v2017
  %v2053 = vunpack.c.l.b16 %v2018
  %v2054 = vunpack.c.l.b16 %v2019
  %v2055 = vpack.c.b16 %v2040, %v2039
  %v2056 = vpack.c.b16 %v2042, %v2041
  %v2057 = vpack.c.b16 %v2044, %v2043
  %v2058 = vpack.c.b16 %v2046, %v2045
  %v2059 = vpack.c.b16 %v2048, %v2047
  %v2060 = vpack.c.b16 %v2050, %v2049
  %v2061 = vpack.c.b16 %v2052, %v2051
  %v2062 = vpack.c.b16 %v2054, %v2053
  %2071 = vmatprep.subr.bf16.mxu0 0
  %2072 = vmatpush1.bf16.msra.mxu0 %v2055
  %2073 = vmatprep.subr.bf16.mxu0 0
  %2074 = vmatpush1.bf16.msra.mxu0 %v2056
  %2075 = vmatprep.subr.bf16.mxu0 0
  %2076 = vmatpush1.bf16.msra.mxu0 %v2057
  %2077 = vmatprep.subr.bf16.mxu0 0
  %2078 = vmatpush1.bf16.msra.mxu0 %v2058
  %2079 = vmatprep.subr.bf16.mxu0 0
  %2080 = vmatpush1.bf16.msra.mxu0 %v2059
  %2081 = vmatprep.subr.bf16.mxu0 0
  %2082 = vmatpush1.bf16.msra.mxu0 %v2060
  %2083 = vmatprep.subr.bf16.mxu0 0
  %2084 = vmatpush1.bf16.msra.mxu0 %v2061
  %2085 = vmatprep.subr.bf16.mxu0 0
  %2086 = vmatpush1.bf16.msra.mxu0 %v2062
  %2087 = vmatprep.subr.bf16.mxu0 0
  %2088 = vmatpush1.bf16.msra.mxu0 0
  %2089 = vmatprep.subr.bf16.mxu0 0
  %2090 = vmatpush1.bf16.msra.mxu0 0
  %2091 = vmatprep.subr.bf16.mxu0 0
  %2092 = vmatpush1.bf16.msra.mxu0 0
  %2093 = vmatprep.subr.bf16.mxu0 0
  %2094 = vmatpush1.bf16.msra.mxu0 0
  %2095 = vmatprep.subr.bf16.mxu0 0
  %2096 = vmatpush1.bf16.msra.mxu0 0
  %2097 = vmatprep.subr.bf16.mxu0 0
  %2098 = vmatpush1.bf16.msra.mxu0 0
  %2099 = vmatprep.subr.bf16.mxu0 0
  %2100 = vmatpush1.bf16.msra.mxu0 0
  %2101 = vmatprep.subr.bf16.mxu0 0
  %2102 = vmatpush1.bf16.msra.mxu0 0
  %2103 = vmatprep.mubr.bf16.mxu0 0
  %2104 = vmatmul.mubr.bf16.gmra.mrb[0].mxu0 %v2021
  %v2105 = vpop.f32.mrb[0].mxu0
  %v2106 = vadd.f32 0.0, %v2105
  %v2107 = vpop.f32.mrb[0].mxu0
  %v2108 = vpop.f32.mrb[0].mxu0
  %v2109 = vpop.f32.mrb[0].mxu0
  %2110 = vdwg.mxu0
  %v2111 = vadd.f32 %v2002, %v2106
  %v2112 = vld [vmem:[%s6] sm:$0x1]
  %v2114 = vlaneseq
  %v2115 = vshrl.u32 %v2114, 7
  %v2116 = vsub.s32 0, %v2115
  %v2117 = vrot.slane %v2112, %v2116
  %v2119 = vadd.f32 %v2111, %v2117
  %v2120 = vmax.f32 %v2119, 0.0
  %v2121 = vpack.c.bf16 %v2120, %v2120
  %v2122 = vld [vmem:[%s7] sm:$0xf]
  %v2123 = vld [vmem:[%s7 + $0x4] sm:$0xf]
  %v2124 = vld [vmem:[%s7 + $0x8] sm:$0xf]
  %v2125 = vld [vmem:[%s7 + $0xc] sm:$0xf]
  %v2126 = vld [vmem:[%s7 + $0x10] sm:$0xf]
  %v2127 = vld [vmem:[%s7 + $0x14] sm:$0xf]
  %v2128 = vld [vmem:[%s7 + $0x18] sm:$0xf]
  %v2129 = vld [vmem:[%s7 + $0x1c] sm:$0xf]
  %v2130 = vld [vmem:[%s7 + $0x20] sm:$0xf]
  %v2131 = vld [vmem:[%s7 + $0x24] sm:$0xf]
  %v2132 = vld [vmem:[%s7 + $0x28] sm:$0xf]
  %v2133 = vld [vmem:[%s7 + $0x2c] sm:$0xf]
  %v2134 = vld [vmem:[%s7 + $0x30] sm:$0xf]
  %v2135 = vld [vmem:[%s7 + $0x34] sm:$0xf]
  %v2136 = vld [vmem:[%s7 + $0x38] sm:$0xf]
  %v2137 = vld [vmem:[%s7 + $0x3c] sm:$0xf]
  %v2138 = vld [vmem:[%s8] sm:$0x1]
  %v2140 = vlaneseq
  %v2141 = vshrl.u32 %v2140, 7
  %v2142 = vsub.s32 0, %v2141
  %v2143 = vrot.slane %v2138, %v2142
  %v2161 = vunpack.c.l.b16 %v2122
  %v2162 = vunpack.c.l.b16 %v2123
  %v2163 = vunpack.c.l.b16 %v2124
  %v2164 = vunpack.c.l.b16 %v2125
  %v2165 = vunpack.c.l.b16 %v2126
  %v2166 = vunpack.c.l.b16 %v2127
  %v2167 = vunpack.c.l.b16 %v2128
  %v2168 = vunpack.c.l.b16 %v2129
  %v2169 = vunpack.c.l.b16 %v2130
  %v2170 = vunpack.c.l.b16 %v2131
  %v2171 = vunpack.c.l.b16 %v2132
  %v2172 = vunpack.c.l.b16 %v2133
  %v2173 = vunpack.c.l.b16 %v2134
  %v2174 = vunpack.c.l.b16 %v2135
  %v2175 = vunpack.c.l.b16 %v2136
  %v2176 = vunpack.c.l.b16 %v2137
  %v2177 = vpack.c.b16 %v2162, %v2161
  %v2178 = vpack.c.b16 %v2164, %v2163
  %v2179 = vpack.c.b16 %v2166, %v2165
  %v2180 = vpack.c.b16 %v2168, %v2167
  %v2181 = vpack.c.b16 %v2170, %v2169
  %v2182 = vpack.c.b16 %v2172, %v2171
  %v2183 = vpack.c.b16 %v2174, %v2173
  %v2184 = vpack.c.b16 %v2176, %v2175
  %2193 = vmatprep.subr.bf16.mxu0 0
  %2194 = vmatpush1.bf16.msra.mxu0 %v2177
  %2195 = vmatprep.subr.bf16.mxu0 0
  %2196 = vmatpush1.bf16.msra.mxu0 %v2178
  %2197 = vmatprep.subr.bf16.mxu0 0
  %2198 = vmatpush1.bf16.msra.mxu0 %v2179
  %2199 = vmatprep.subr.bf16.mxu0 0
  %2200 = vmatpush1.bf16.msra.mxu0 %v2180
  %2201 = vmatprep.subr.bf16.mxu0 0
  %2202 = vmatpush1.bf16.msra.mxu0 %v2181
  %2203 = vmatprep.subr.bf16.mxu0 0
  %2204 = vmatpush1.bf16.msra.mxu0 %v2182
  %2205 = vmatprep.subr.bf16.mxu0 0
  %2206 = vmatpush1.bf16.msra.mxu0 %v2183
  %2207 = vmatprep.subr.bf16.mxu0 0
  %2208 = vmatpush1.bf16.msra.mxu0 %v2184
  %2209 = vmatprep.subr.bf16.mxu0 0
  %2210 = vmatpush1.bf16.msra.mxu0 0
  %2211 = vmatprep.subr.bf16.mxu0 0
  %2212 = vmatpush1.bf16.msra.mxu0 0
  %2213 = vmatprep.subr.bf16.mxu0 0
  %2214 = vmatpush1.bf16.msra.mxu0 0
  %2215 = vmatprep.subr.bf16.mxu0 0
  %2216 = vmatpush1.bf16.msra.mxu0 0
  %2217 = vmatprep.subr.bf16.mxu0 0
  %2218 = vmatpush1.bf16.msra.mxu0 0
  %2219 = vmatprep.subr.bf16.mxu0 0
  %2220 = vmatpush1.bf16.msra.mxu0 0
  %2221 = vmatprep.subr.bf16.mxu0 0
  %2222 = vmatpush1.bf16.msra.mxu0 0
  %2223 = vmatprep.subr.bf16.mxu0 0
  %2224 = vmatpush1.bf16.msra.mxu0 0
  %2225 = vmatprep.mubr.bf16.mxu0 0
  %2226 = vmatmul.mubr.bf16.gmra.mrb[0].mxu0 %v2121
  %v2227 = vpop.f32.mrb[0].mxu0
  %v2228 = vadd.f32 %v2143, %v2227
  %v2229 = vpop.f32.mrb[0].mxu0
  %v2230 = vpop.f32.mrb[0].mxu0
  %v2231 = vpop.f32.mrb[0].mxu0
  %2232 = vdwg.mxu0
  %2233 = vst [vmem:[%s9] sm:$0xff] %v2228
  // Predicated region
  $region38: #{cnn_forward.1} parent=0 // pred_check
    _
  $region39: #{cnn_forward.1} parent=0 // pred_check_branch
    %2235 = sbr.rel (0) target = $region41
  $region40: #{cnn_forward.1} parent=0 // pred_region
    _
  $region41: #{cnn_forward.1} parent=0 // pred_fallthru
    _
  // Predicated region
  $region42: #{cnn_forward.1} parent=0 // pred_check
    _
  $region43: #{cnn_forward.1} parent=0 // pred_check_branch
    %2237 = sbr.rel (0) target = $region45
  $region44: #{cnn_forward.1} parent=0 // pred_region
    _
  $region45: #{cnn_forward.1} parent=0 // pred_fallthru
    _

</llo_original>
